<compile_context>
chip_gen: v7x
topology: tpu7x:2x2x1
jax: 0.10.0
libtpu: 0.0.40
codegen_flags: <defaults>
</compile_context>

<pallas_src>
import functools

import jax
import jax.numpy as jnp
from jax import lax
from jax.experimental import pallas as pl
from jax.experimental.pallas import tpu as pltpu


# ----------------------------------------------------------------------------
# Pallas kernel: fused 3x3/stride-2 conv (as 2x2/stride-1 over space-to-depth
# input) + folded-BN bias + ReLU.
# ----------------------------------------------------------------------------
def _conv2x2_kernel(xs_ref, w_ref, b_ref, o_ref, *, relu):
    """One grid step produces a (bt, th, wo, n) output tile.

    xs_ref: (bt, hs, ws, cd) bf16 space-to-depth activation plane (resident)
    w_ref : (2, 2, cd, n)    bf16 weight, BN scale folded in (VMEM-resident)
    b_ref : (1, n)           f32 folded-BN bias
    The four shifted-window matmuls are accumulated in f32 vregs; bias + ReLU
    are fused into the single store (no scratch accumulator, no K grid axis).
    """
    bt, th, wo, n = o_ref.shape
    cd = xs_ref.shape[-1]
    row0 = pl.program_id(1) * th          # first output row of this tile

    acc = None
    for ki in range(2):
        for kj in range(2):
            win = xs_ref[:, pl.ds(row0 + ki, th), pl.ds(kj, wo), :]
            part = jnp.dot(win.reshape(bt * th * wo, cd), w_ref[ki, kj],
                           preferred_element_type=jnp.float32)
            acc = part if acc is None else acc + part

    out = acc + b_ref[...]                # f32 epilogue
    if relu:
        out = jnp.maximum(out, 0.0)
    o_ref[...] = out.reshape(bt, th, wo, n).astype(o_ref.dtype)


def _round_up(x, m):
    return (x + m - 1) // m * m


def _choose_tiles(batch, ho, wo, plane_bytes, target_rows=512,
                  plane_budget=8 << 20):
    """Pick (batch-tile, output-row-tile) so each grid step feeds the MXU a
    tall M (target ~512 rows) while bounding the resident input plane."""
    m_img = ho * wo
    if m_img >= target_rows:
        bt = 1
        th = min(ho, max(1, target_rows // max(wo, 1)))
        while ho % th:
            th -= 1
    else:
        th = ho
        bt = min(batch, max(1, target_rows // max(m_img, 1)),
                 max(1, plane_budget // max(plane_bytes, 1)))
        while batch % bt:
            bt -= 1
    return bt, th


def conv3x3s2_fused(xs, w, b, *, ho, wo, relu=True, out_dtype=jnp.bfloat16):
    """Fused-backbone 3x3/stride-2 conv + bias + ReLU on a space-to-depth
    input.  xs: (B, hs, ws, cd) bf16, w: (2, 2, cd, n) bf16, b: (1, n) f32."""
    B, hs, ws, cd = xs.shape
    kh, kw, cdw, n = w.shape
    assert (kh, kw) == (2, 2) and cdw == cd and b.shape == (1, n)
    assert n % 128 == 0, "pad N to a lane-dense multiple of 128"
    assert hs >= ho + 1 and ws >= wo + 1

    # Whole weight stays VMEM-resident (constant index_map, single K block).
    # TODO(synk): re-introduce K tiling only if the weight ever exceeds ~40MB.
    assert w.size * w.dtype.itemsize < 40 * 1024 * 1024

    plane_bytes = hs * ws * cd * xs.dtype.itemsize
    bt, th = _choose_tiles(B, ho, wo, plane_bytes)
    grid = (B // bt, ho // th)

    out_itemsize = jnp.dtype(out_dtype).itemsize
    xs_blk = bt * plane_bytes
    o_blk = bt * th * wo * n * out_itemsize
    w_bytes = w.size * w.dtype.itemsize
    need = 2 * xs_blk + 2 * (w_bytes + n * 4) + 2 * o_blk + (2 << 20)
    vmem_limit = int(min(max(need, 32 << 20), 48 << 20))

    m_total = B * ho * wo
    cost = pl.CostEstimate(
        flops=int(2 * 4 * m_total * cd * n),
        transcendentals=0,
        bytes_accessed=int(xs.size * xs.dtype.itemsize + w_bytes + n * 4
                           + m_total * n * out_itemsize))

    kernel = functools.partial(_conv2x2_kernel, relu=relu)
    return pl.pallas_call(
        kernel,
        out_shape=jax.ShapeDtypeStruct((B, ho, wo, n), out_dtype),
        grid=grid,
        in_specs=[
            # Full activation plane per batch tile; block index ignores the
            # row-tile axis -> fetched once per batch tile, kept resident.
            pl.BlockSpec((bt, hs, ws, cd), lambda ib, ih: (ib, 0, 0, 0)),
            # Weight + bias: constant block index -> VMEM-resident.
            pl.BlockSpec((2, 2, cd, n), lambda ib, ih: (0, 0, 0, 0)),
            pl.BlockSpec((1, n), lambda ib, ih: (0, 0)),
        ],
        out_specs=pl.BlockSpec((bt, th, wo, n),
                               lambda ib, ih: (ib, ih, 0, 0)),
        compiler_params=pltpu.CompilerParams(
            dimension_semantics=("parallel", "arbitrary"),
            vmem_limit_bytes=vmem_limit),
        cost_estimate=cost,
    )(xs, w, b)


# ----------------------------------------------------------------------------
# Glue (plain JAX): space-to-depth layout pass, fused parameter construction
# ----------------------------------------------------------------------------
def space_to_depth_pad(x, pad=1):
    """NHWC (B,H,W,C) -> zero-padded, factor-2 space-to-depth (B,hs,ws,4C).
    Channel block p = 2*di + dj holds sub-pixel (di, dj)."""
    B, H, W, C = x.shape
    hp, wp = H + 2 * pad, W + 2 * pad
    eh, ew = hp % 2, wp % 2
    xp = jnp.pad(x, ((0, 0), (pad, pad + eh), (pad, pad + ew), (0, 0)))
    hs, ws = (hp + eh) // 2, (wp + ew) // 2
    xs = xp.reshape(B, hs, 2, ws, 2, C).transpose(0, 1, 3, 2, 4, 5)
    return xs.reshape(B, hs, ws, 4 * C)


def _fold_bn(key, c_out):
    kg, kb, km, kv = jax.random.split(key, 4)
    gamma = 1.0 + 0.1 * jax.random.normal(kg, (c_out,), jnp.float32)
    beta = 0.1 * jax.random.normal(kb, (c_out,), jnp.float32)
    mean = 0.1 * jax.random.normal(km, (c_out,), jnp.float32)
    var = jnp.abs(jax.random.normal(kv, (c_out,), jnp.float32)) + 1.0
    scale = gamma / jnp.sqrt(var + 1e-5)   # eval-mode folded BN
    bias = beta - mean * scale
    return scale, bias


def make_encoder_params(key, c_in, channels, lane_pad=128):
    """Per-stage fused parameters for the two-backbone encoder stand-in.

    Stage 1: both backbones read the same image -> weights concatenated along
    N.  Later stages: block-diagonal weight over the combined channel axis.
    The 3x3/stride-2 conv is re-expressed as a 2x2/stride-1 conv over the
    space-to-depth(2) input; BN scale folded into the weight, shift into the
    bias; N zero-padded to a lane-dense multiple of 128."""
    n_bb = 2
    stages = []
    c_prev = c_in
    shared_input = True
    for c_out in channels:
        w_list, b_list = [], []
        for _ in range(n_bb):
            key, k_w, k_bn = jax.random.split(key, 3)
            w = 0.1 * jax.random.normal(k_w, (c_out, c_prev, 3, 3),
                                        jnp.float32)
            scale, bias = _fold_bn(k_bn, c_out)
            w_list.append(w * scale[:, None, None, None])   # fold BN scale
            b_list.append(bias)

        if shared_input:
            c_in_f = c_prev
            wpos = jnp.concatenate([w.transpose(2, 3, 1, 0) for w in w_list],
                                   axis=-1)           # (3,3,c_in_f, 2*c_out)
        else:
            c_in_f = n_bb * c_prev
            wpos = jnp.zeros((3, 3, c_in_f, n_bb * c_out), jnp.float32)
            for i, w in enumerate(w_list):
                wpos = wpos.at[:, :, i * c_prev:(i + 1) * c_prev,
                               i * c_out:(i + 1) * c_out].set(
                                   w.transpose(2, 3, 1, 0))

        n_valid = n_bb * c_out
        n_pad = max(_round_up(n_valid, lane_pad), lane_pad)
        cd = 4 * c_in_f
        # 3x3 kernel position (2*ki+di, 2*kj+dj) -> d2s position (ki,kj),
        # channel block p = 2*di + dj; positions outside 3x3 stay zero.
        wd = jnp.zeros((2, 2, cd, n_pad), jnp.float32)
        for ki in range(2):
            for kj in range(2):
                for di in range(2):
                    for dj in range(2):
                        oki, okj = 2 * ki + di, 2 * kj + dj
                        if oki < 3 and okj < 3:
                            p = 2 * di + dj
                            wd = wd.at[ki, kj,
                                       p * c_in_f:(p + 1) * c_in_f,
                                       :n_valid].set(wpos[oki, okj])
        b_pad = jnp.zeros((1, n_pad), jnp.float32).at[0, :n_valid].set(
            jnp.concatenate(b_list))

        stages.append(dict(wd=wd.astype(jnp.bfloat16), bias=b_pad,
                           c_in_fused=c_in_f, n_valid=n_valid,
                           w_torch=w_list, b_torch=b_list))
        c_prev = c_out
        shared_input = False
    return stages


def encoder_forward(x_nchw, stages):
    """Fused two-backbone encoder.  Output (B, Ho*Wo, 2*C_last): channels are
    [imagenet features | aesthetic features] (the original concat)."""
    B = x_nchw.shape[0]
    x = jnp.transpose(x_nchw, (0, 2, 3, 1))        # one NCHW->NHWC pass
    n_stage = len(stages)
    for s, st in enumerate(stages):
        last = s == n_stage - 1
        H, W = x.shape[1], x.shape[2]
        ho = (H + 2 - 3) // 2 + 1
        wo = (W + 2 - 3) // 2 + 1
        # Slice to the fused valid channels + pad + space-to-depth in ONE
        # XLA layout pass (~1.0x activation; the old im2col was 2.25x).
        xs = space_to_depth_pad(
            x[..., :st["c_in_fused"]].astype(jnp.bfloat16), pad=1)
        y = conv3x3s2_fused(
            xs, st["wd"], st["bias"], ho=ho, wo=wo, relu=True,
            out_dtype=jnp.float32 if last else jnp.bfloat16)
        if last:
            return y[..., :st["n_valid"]].reshape(B, ho * wo, st["n_valid"])
        x = y   # stay NHWC bf16; lane-padded channels are exact zeros


def encoder_forward_reference(x_nchw, stages):
    """Independent jnp/lax reference (per-backbone convs, then concat)."""
    x = jnp.transpose(x_nchw, (0, 2, 3, 1)).astype(jnp.bfloat16)
    feats = [x, x]
    n_stage = len(stages)
    for s, st in enumerate(stages):
        last = s == n_stage - 1
        new_feats = []
        for b_i in range(2):
            w = st["w_torch"][b_i].astype(jnp.bfloat16)    # (c_out,c_in,3,3)
            y = lax.conv_general_dilated(
                feats[b_i], w, window_strides=(2, 2),
                padding=((1, 1), (1, 1)),
                dimension_numbers=("NHWC", "OIHW", "NHWC"),
                preferred_element_type=jnp.float32)
            y = jnp.maximum(y + st["b_torch"][b_i][None, None, None, :], 0.0)
            new_feats.append(y if last else y.astype(jnp.bfloat16))
        feats = new_feats
    out = jnp.concatenate(feats, axis=-1)
    B, ho, wo, c = out.shape
    return out.reshape(B, ho * wo, c)


# ----------------------------------------------------------------------------
if __name__ == "__main__":
    key = jax.random.PRNGKey(0)
    kx, kp = jax.random.split(key)

    B, C_in, H, W = 2, 3, 16, 16
    x = jax.random.normal(kx, (B, C_in, H, W), jnp.float32)

    channels = (16, 32)   # two stride-2 stages: 16x16 -> 8x8 -> 4x4
    params = make_encoder_params(kp, C_in, channels)

    fwd = jax.jit(lambda inp: encoder_forward(inp, params))
    out = jax.block_until_ready(fwd(x))

    # (B, Ho*Wo, 2*C_last) == (2, 16, 64)
    assert out.shape == (B, (H // 4) * (W // 4), 2 * channels[-1]), out.shape

    ref = encoder_forward_reference(x, params)
    max_err = float(jnp.max(jnp.abs(out - ref)))
    assert max_err < 5e-2, f"mismatch vs reference: {max_err}"

    print("KERNEL_OK")
</pallas_src>

<mosaic_0001>
module attributes {stable_mosaic.version = 11 : i64} {
  func.func @_conv2x2_kernel(%arg0: i32, %arg1: i32, %arg2: memref<2x9x9x12xbf16, #tpu.memory_space<vmem>>, %arg3: memref<2x2x12x128xbf16, #tpu.memory_space<vmem>>, %arg4: memref<1x128xf32, #tpu.memory_space<vmem>>, %arg5: memref<2x8x8x128xbf16, #tpu.memory_space<vmem>>) attributes {dimension_semantics = [#tpu.dimension_semantics<parallel>, #tpu.dimension_semantics<arbitrary>], iteration_bounds = array<i64: 1, 1>, scalar_prefetch = 0 : i64, scratch_operands = 0 : i64, tpu.core_type = #tpu.core_type<tc>, window_params = [{transform_indices = @transform_0, window_bounds = array<i64: 2, 9, 9, 12>}, {pipeline_mode = #tpu.pipeline_mode<synchronous>, transform_indices = @transform_1, window_bounds = array<i64: 2, 2, 12, 128>}, {pipeline_mode = #tpu.pipeline_mode<synchronous>, transform_indices = @transform_2, window_bounds = array<i64: 1, 128>}, {transform_indices = @transform_3, window_bounds = array<i64: 2, 8, 8, 128>}]} {
    %c8_i32 = arith.constant 8 : i32
    %0 = arith.muli %arg1, %c8_i32 : i32
    %c0_i32 = arith.constant 0 : i32
    %1 = arith.addi %0, %c0_i32 : i32
    %c0 = arith.constant 0 : index
    %2 = arith.index_cast %1 : i32 to index
    %c0_0 = arith.constant 0 : index
    %c0_1 = arith.constant 0 : index
    %3 = vector.load %arg2[%c0, %2, %c0_0, %c0_1] : memref<2x9x9x12xbf16, #tpu.memory_space<vmem>>, vector<2x8x8x12xbf16>
    %4 = vector.shape_cast %3 : vector<2x8x8x12xbf16> to vector<128x12xbf16>
    %c0_2 = arith.constant 0 : index
    %c0_3 = arith.constant 0 : index
    %c0_4 = arith.constant 0 : index
    %c0_5 = arith.constant 0 : index
    %5 = vector.load %arg3[%c0_2, %c0_3, %c0_4, %c0_5] : memref<2x2x12x128xbf16, #tpu.memory_space<vmem>>, vector<1x1x12x128xbf16>
    %6 = vector.shape_cast %5 : vector<1x1x12x128xbf16> to vector<12x128xbf16>
    %cst = arith.constant dense<0.000000e+00> : vector<128x128xf32>
    %7 = tpu.matmul %4, %6, %cst {dimension_numbers = #tpu.dot_dimension_numbers<[1], [0], [0], [1], [0, 0, 1, 1], [], []>} : vector<128x12xbf16>, vector<12x128xbf16>, vector<128x128xf32> -> vector<128x128xf32>
    %c0_i32_6 = arith.constant 0 : i32
    %8 = arith.addi %0, %c0_i32_6 : i32
    %c0_7 = arith.constant 0 : index
    %9 = arith.index_cast %8 : i32 to index
    %c1 = arith.constant 1 : index
    %c0_8 = arith.constant 0 : index
    %10 = vector.load %arg2[%c0_7, %9, %c1, %c0_8] : memref<2x9x9x12xbf16, #tpu.memory_space<vmem>>, vector<2x8x8x12xbf16>
    %11 = vector.shape_cast %10 : vector<2x8x8x12xbf16> to vector<128x12xbf16>
    %c0_9 = arith.constant 0 : index
    %c1_10 = arith.constant 1 : index
    %c0_11 = arith.constant 0 : index
    %c0_12 = arith.constant 0 : index
    %12 = vector.load %arg3[%c0_9, %c1_10, %c0_11, %c0_12] : memref<2x2x12x128xbf16, #tpu.memory_space<vmem>>, vector<1x1x12x128xbf16>
    %13 = vector.shape_cast %12 : vector<1x1x12x128xbf16> to vector<12x128xbf16>
    %cst_13 = arith.constant dense<0.000000e+00> : vector<128x128xf32>
    %14 = tpu.matmul %11, %13, %cst_13 {dimension_numbers = #tpu.dot_dimension_numbers<[1], [0], [0], [1], [0, 0, 1, 1], [], []>} : vector<128x12xbf16>, vector<12x128xbf16>, vector<128x128xf32> -> vector<128x128xf32>
    %15 = arith.addf %7, %14 : vector<128x128xf32>
    %c1_i32 = arith.constant 1 : i32
    %16 = arith.addi %0, %c1_i32 : i32
    %c0_14 = arith.constant 0 : index
    %17 = arith.index_cast %16 : i32 to index
    %c0_15 = arith.constant 0 : index
    %c0_16 = arith.constant 0 : index
    %18 = vector.load %arg2[%c0_14, %17, %c0_15, %c0_16] : memref<2x9x9x12xbf16, #tpu.memory_space<vmem>>, vector<2x8x8x12xbf16>
    %19 = vector.shape_cast %18 : vector<2x8x8x12xbf16> to vector<128x12xbf16>
    %c1_17 = arith.constant 1 : index
    %c0_18 = arith.constant 0 : index
    %c0_19 = arith.constant 0 : index
    %c0_20 = arith.constant 0 : index
    %20 = vector.load %arg3[%c1_17, %c0_18, %c0_19, %c0_20] : memref<2x2x12x128xbf16, #tpu.memory_space<vmem>>, vector<1x1x12x128xbf16>
    %21 = vector.shape_cast %20 : vector<1x1x12x128xbf16> to vector<12x128xbf16>
    %cst_21 = arith.constant dense<0.000000e+00> : vector<128x128xf32>
    %22 = tpu.matmul %19, %21, %cst_21 {dimension_numbers = #tpu.dot_dimension_numbers<[1], [0], [0], [1], [0, 0, 1, 1], [], []>} : vector<128x12xbf16>, vector<12x128xbf16>, vector<128x128xf32> -> vector<128x128xf32>
    %23 = arith.addf %15, %22 : vector<128x128xf32>
    %c1_i32_22 = arith.constant 1 : i32
    %24 = arith.addi %0, %c1_i32_22 : i32
    %c0_23 = arith.constant 0 : index
    %25 = arith.index_cast %24 : i32 to index
    %c1_24 = arith.constant 1 : index
    %c0_25 = arith.constant 0 : index
    %26 = vector.load %arg2[%c0_23, %25, %c1_24, %c0_25] : memref<2x9x9x12xbf16, #tpu.memory_space<vmem>>, vector<2x8x8x12xbf16>
    %27 = vector.shape_cast %26 : vector<2x8x8x12xbf16> to vector<128x12xbf16>
    %c1_26 = arith.constant 1 : index
    %c1_27 = arith.constant 1 : index
    %c0_28 = arith.constant 0 : index
    %c0_29 = arith.constant 0 : index
    %28 = vector.load %arg3[%c1_26, %c1_27, %c0_28, %c0_29] : memref<2x2x12x128xbf16, #tpu.memory_space<vmem>>, vector<1x1x12x128xbf16>
    %29 = vector.shape_cast %28 : vector<1x1x12x128xbf16> to vector<12x128xbf16>
    %cst_30 = arith.constant dense<0.000000e+00> : vector<128x128xf32>
    %30 = tpu.matmul %27, %29, %cst_30 {dimension_numbers = #tpu.dot_dimension_numbers<[1], [0], [0], [1], [0, 0, 1, 1], [], []>} : vector<128x12xbf16>, vector<12x128xbf16>, vector<128x128xf32> -> vector<128x128xf32>
    %31 = arith.addf %23, %30 : vector<128x128xf32>
    %c0_31 = arith.constant 0 : index
    %c0_32 = arith.constant 0 : index
    %32 = vector.load %arg4[%c0_31, %c0_32] : memref<1x128xf32, #tpu.memory_space<vmem>>, vector<1x128xf32>
    %33 = vector.broadcast %32 : vector<1x128xf32> to vector<128x128xf32>
    %34 = arith.addf %31, %33 : vector<128x128xf32>
    %cst_33 = arith.constant 0.000000e+00 : f32
    %35 = vector.broadcast %cst_33 : f32 to vector<128x128xf32>
    %36 = arith.maximumf %34, %35 : vector<128x128xf32>
    %37 = vector.shape_cast %36 : vector<128x128xf32> to vector<2x8x8x128xf32>
    %38 = arith.truncf %37 : vector<2x8x8x128xf32> to vector<2x8x8x128xbf16>
    %c0_34 = arith.constant 0 : index
    %c0_35 = arith.constant 0 : index
    %c0_36 = arith.constant 0 : index
    %c0_37 = arith.constant 0 : index
    %39 = vector.load %arg5[%c0_34, %c0_35, %c0_36, %c0_37] : memref<2x8x8x128xbf16, #tpu.memory_space<vmem>>, vector<2x8x8x128xbf16>
    tpu.vector_store %arg5[%c0_34, %c0_35, %c0_36, %c0_37], %38 {strides = array<i32>} : memref<2x8x8x128xbf16, #tpu.memory_space<vmem>>, vector<2x8x8x128xbf16>,
    return
  }
  func.func @transform_0(%arg0: i32, %arg1: i32) -> (i32, i32, i32, i32) {
    %c0_i32 = arith.constant 0 : i32
    %c0_i32_0 = arith.constant 0 : i32
    %c0_i32_1 = arith.constant 0 : i32
    %c0_i32_2 = arith.constant 0 : i32
    return %arg0, %c0_i32, %c0_i32_0, %c0_i32_1 : i32, i32, i32, i32
  }
  func.func @transform_1(%arg0: i32, %arg1: i32) -> (i32, i32, i32, i32) {
    %c0_i32 = arith.constant 0 : i32
    %c0_i32_0 = arith.constant 0 : i32
    %c0_i32_1 = arith.constant 0 : i32
    %c0_i32_2 = arith.constant 0 : i32
    %c0_i32_3 = arith.constant 0 : i32
    return %c0_i32, %c0_i32_0, %c0_i32_1, %c0_i32_2 : i32, i32, i32, i32
  }
  func.func @transform_2(%arg0: i32, %arg1: i32) -> (i32, i32) {
    %c0_i32 = arith.constant 0 : i32
    %c0_i32_0 = arith.constant 0 : i32
    %c0_i32_1 = arith.constant 0 : i32
    return %c0_i32, %c0_i32_0 : i32, i32
  }
  func.func @transform_3(%arg0: i32, %arg1: i32) -> (i32, i32, i32, i32) {
    %c0_i32 = arith.constant 0 : i32
    %c0_i32_0 = arith.constant 0 : i32
    %c0_i32_1 = arith.constant 0 : i32
    return %arg0, %arg1, %c0_i32, %c0_i32_0 : i32, i32, i32, i32
  }
}

module attributes {stable_mosaic.version = 11 : i64} {
  func.func @_conv2x2_kernel(%arg0: i32, %arg1: i32, %arg2: memref<2x5x5x128xbf16, #tpu.memory_space<vmem>>, %arg3: memref<2x2x128x128xbf16, #tpu.memory_space<vmem>>, %arg4: memref<1x128xf32, #tpu.memory_space<vmem>>, %arg5: memref<2x4x4x128xf32, #tpu.memory_space<vmem>>) attributes {dimension_semantics = [#tpu.dimension_semantics<parallel>, #tpu.dimension_semantics<arbitrary>], iteration_bounds = array<i64: 1, 1>, scalar_prefetch = 0 : i64, scratch_operands = 0 : i64, tpu.core_type = #tpu.core_type<tc>, window_params = [{transform_indices = @transform_0, window_bounds = array<i64: 2, 5, 5, 128>}, {pipeline_mode = #tpu.pipeline_mode<synchronous>, transform_indices = @transform_1, window_bounds = array<i64: 2, 2, 128, 128>}, {pipeline_mode = #tpu.pipeline_mode<synchronous>, transform_indices = @transform_2, window_bounds = array<i64: 1, 128>}, {transform_indices = @transform_3, window_bounds = array<i64: 2, 4, 4, 128>}]} {
    %c4_i32 = arith.constant 4 : i32
    %0 = arith.muli %arg1, %c4_i32 : i32
    %c0_i32 = arith.constant 0 : i32
    %1 = arith.addi %0, %c0_i32 : i32
    %c0 = arith.constant 0 : index
    %2 = arith.index_cast %1 : i32 to index
    %c0_0 = arith.constant 0 : index
    %c0_1 = arith.constant 0 : index
    %3 = vector.load %arg2[%c0, %2, %c0_0, %c0_1] : memref<2x5x5x128xbf16, #tpu.memory_space<vmem>>, vector<2x4x4x128xbf16>
    %4 = vector.shape_cast %3 : vector<2x4x4x128xbf16> to vector<32x128xbf16>
    %c0_2 = arith.constant 0 : index
    %c0_3 = arith.constant 0 : index
    %c0_4 = arith.constant 0 : index
    %c0_5 = arith.constant 0 : index
    %5 = vector.load %arg3[%c0_2, %c0_3, %c0_4, %c0_5] : memref<2x2x128x128xbf16, #tpu.memory_space<vmem>>, vector<1x1x128x128xbf16>
    %6 = vector.shape_cast %5 : vector<1x1x128x128xbf16> to vector<128x128xbf16>
    %cst = arith.constant dense<0.000000e+00> : vector<32x128xf32>
    %7 = tpu.matmul %4, %6, %cst {dimension_numbers = #tpu.dot_dimension_numbers<[1], [0], [0], [1], [0, 0, 1, 1], [], []>} : vector<32x128xbf16>, vector<128x128xbf16>, vector<32x128xf32> -> vector<32x128xf32>
    %c0_i32_6 = arith.constant 0 : i32
    %8 = arith.addi %0, %c0_i32_6 : i32
    %c0_7 = arith.constant 0 : index
    %9 = arith.index_cast %8 : i32 to index
    %c1 = arith.constant 1 : index
    %c0_8 = arith.constant 0 : index
    %10 = vector.load %arg2[%c0_7, %9, %c1, %c0_8] : memref<2x5x5x128xbf16, #tpu.memory_space<vmem>>, vector<2x4x4x128xbf16>
    %11 = vector.shape_cast %10 : vector<2x4x4x128xbf16> to vector<32x128xbf16>
    %c0_9 = arith.constant 0 : index
    %c1_10 = arith.constant 1 : index
    %c0_11 = arith.constant 0 : index
    %c0_12 = arith.constant 0 : index
    %12 = vector.load %arg3[%c0_9, %c1_10, %c0_11, %c0_12] : memref<2x2x128x128xbf16, #tpu.memory_space<vmem>>, vector<1x1x128x128xbf16>
    %13 = vector.shape_cast %12 : vector<1x1x128x128xbf16> to vector<128x128xbf16>
    %cst_13 = arith.constant dense<0.000000e+00> : vector<32x128xf32>
    %14 = tpu.matmul %11, %13, %cst_13 {dimension_numbers = #tpu.dot_dimension_numbers<[1], [0], [0], [1], [0, 0, 1, 1], [], []>} : vector<32x128xbf16>, vector<128x128xbf16>, vector<32x128xf32> -> vector<32x128xf32>
    %15 = arith.addf %7, %14 : vector<32x128xf32>
    %c1_i32 = arith.constant 1 : i32
    %16 = arith.addi %0, %c1_i32 : i32
    %c0_14 = arith.constant 0 : index
    %17 = arith.index_cast %16 : i32 to index
    %c0_15 = arith.constant 0 : index
    %c0_16 = arith.constant 0 : index
    %18 = vector.load %arg2[%c0_14, %17, %c0_15, %c0_16] : memref<2x5x5x128xbf16, #tpu.memory_space<vmem>>, vector<2x4x4x128xbf16>
    %19 = vector.shape_cast %18 : vector<2x4x4x128xbf16> to vector<32x128xbf16>
    %c1_17 = arith.constant 1 : index
    %c0_18 = arith.constant 0 : index
    %c0_19 = arith.constant 0 : index
    %c0_20 = arith.constant 0 : index
    %20 = vector.load %arg3[%c1_17, %c0_18, %c0_19, %c0_20] : memref<2x2x128x128xbf16, #tpu.memory_space<vmem>>, vector<1x1x128x128xbf16>
    %21 = vector.shape_cast %20 : vector<1x1x128x128xbf16> to vector<128x128xbf16>
    %cst_21 = arith.constant dense<0.000000e+00> : vector<32x128xf32>
    %22 = tpu.matmul %19, %21, %cst_21 {dimension_numbers = #tpu.dot_dimension_numbers<[1], [0], [0], [1], [0, 0, 1, 1], [], []>} : vector<32x128xbf16>, vector<128x128xbf16>, vector<32x128xf32> -> vector<32x128xf32>
    %23 = arith.addf %15, %22 : vector<32x128xf32>
    %c1_i32_22 = arith.constant 1 : i32
    %24 = arith.addi %0, %c1_i32_22 : i32
    %c0_23 = arith.constant 0 : index
    %25 = arith.index_cast %24 : i32 to index
    %c1_24 = arith.constant 1 : index
    %c0_25 = arith.constant 0 : index
    %26 = vector.load %arg2[%c0_23, %25, %c1_24, %c0_25] : memref<2x5x5x128xbf16, #tpu.memory_space<vmem>>, vector<2x4x4x128xbf16>
    %27 = vector.shape_cast %26 : vector<2x4x4x128xbf16> to vector<32x128xbf16>
    %c1_26 = arith.constant 1 : index
    %c1_27 = arith.constant 1 : index
    %c0_28 = arith.constant 0 : index
    %c0_29 = arith.constant 0 : index
    %28 = vector.load %arg3[%c1_26, %c1_27, %c0_28, %c0_29] : memref<2x2x128x128xbf16, #tpu.memory_space<vmem>>, vector<1x1x128x128xbf16>
    %29 = vector.shape_cast %28 : vector<1x1x128x128xbf16> to vector<128x128xbf16>
    %cst_30 = arith.constant dense<0.000000e+00> : vector<32x128xf32>
    %30 = tpu.matmul %27, %29, %cst_30 {dimension_numbers = #tpu.dot_dimension_numbers<[1], [0], [0], [1], [0, 0, 1, 1], [], []>} : vector<32x128xbf16>, vector<128x128xbf16>, vector<32x128xf32> -> vector<32x128xf32>
    %31 = arith.addf %23, %30 : vector<32x128xf32>
    %c0_31 = arith.constant 0 : index
    %c0_32 = arith.constant 0 : index
    %32 = vector.load %arg4[%c0_31, %c0_32] : memref<1x128xf32, #tpu.memory_space<vmem>>, vector<1x128xf32>
    %33 = vector.broadcast %32 : vector<1x128xf32> to vector<32x128xf32>
    %34 = arith.addf %31, %33 : vector<32x128xf32>
    %cst_33 = arith.constant 0.000000e+00 : f32
    %35 = vector.broadcast %cst_33 : f32 to vector<32x128xf32>
    %36 = arith.maximumf %34, %35 : vector<32x128xf32>
    %37 = vector.shape_cast %36 : vector<32x128xf32> to vector<2x4x4x128xf32>
    %c0_34 = arith.constant 0 : index
    %c0_35 = arith.constant 0 : index
    %c0_36 = arith.constant 0 : index
    %c0_37 = arith.constant 0 : index
    %38 = vector.load %arg5[%c0_34, %c0_35, %c0_36, %c0_37] : memref<2x4x4x128xf32, #tpu.memory_space<vmem>>, vector<2x4x4x128xf32>
    tpu.vector_store %arg5[%c0_34, %c0_35, %c0_36, %c0_37], %37 {strides = array<i32>} : memref<2x4x4x128xf32, #tpu.memory_space<vmem>>, vector<2x4x4x128xf32>,
    return
  }
  func.func @transform_0(%arg0: i32, %arg1: i32) -> (i32, i32, i32, i32) {
    %c0_i32 = arith.constant 0 : i32
    %c0_i32_0 = arith.constant 0 : i32
    %c0_i32_1 = arith.constant 0 : i32
    %c0_i32_2 = arith.constant 0 : i32
    return %arg0, %c0_i32, %c0_i32_0, %c0_i32_1 : i32, i32, i32, i32
  }
  func.func @transform_1(%arg0: i32, %arg1: i32) -> (i32, i32, i32, i32) {
    %c0_i32 = arith.constant 0 : i32
    %c0_i32_0 = arith.constant 0 : i32
    %c0_i32_1 = arith.constant 0 : i32
    %c0_i32_2 = arith.constant 0 : i32
    %c0_i32_3 = arith.constant 0 : i32
    return %c0_i32, %c0_i32_0, %c0_i32_1, %c0_i32_2 : i32, i32, i32, i32
  }
  func.func @transform_2(%arg0: i32, %arg1: i32) -> (i32, i32) {
    %c0_i32 = arith.constant 0 : i32
    %c0_i32_0 = arith.constant 0 : i32
    %c0_i32_1 = arith.constant 0 : i32
    return %c0_i32, %c0_i32_0 : i32, i32
  }
  func.func @transform_3(%arg0: i32, %arg1: i32) -> (i32, i32, i32, i32) {
    %c0_i32 = arith.constant 0 : i32
    %c0_i32_0 = arith.constant 0 : i32
    %c0_i32_1 = arith.constant 0 : i32
    return %arg0, %arg1, %c0_i32, %c0_i32_0 : i32, i32, i32, i32
  }
}

</mosaic_0001>

<llo_original>
// kernel: _lambda_.2
$region0: #{_lambda_.2}
  #allocation0 [shape = 'u32[]', space=smem, size = 0x4, offset = 0x4, fixed_abs, tag = 'smem constant byte address 0x4 - core index']
  #allocation1 [shape = 'u32[144,128]{1,0:T(1,128)}', space=vmem, size = 0x12000, scoped, tag = 'internal scratch']
  %s0 = inlined_call_operand.vmem [shape: bf16[2,9,9,12], index: 0, kind: input, shape index: {}]
  %s1 = inlined_call_operand.vmem [shape: bf16[2,2,12,128], index: 1, kind: input, shape index: {}]
  %s2 = inlined_call_operand.vmem [shape: f32[1,128], index: 2, kind: input, shape index: {}]
  %s3 = inlined_call_operand.vmem [shape: bf16[2,8,8,128], index: 3, kind: output, shape index: {}]
  %s4 = sld [smem:[#allocation0]]
  $region22: #{_lambda_.2} parent=0
    _
  %s6 = ssub.s32 1, %s4
  %s7 = scalar_select 0, %s6, %s4
  // Predicated region
  $region2: #{_lambda_.2} parent=0 // pred_check
    _
  $region3: #{_lambda_.2} parent=0 // pred_check_branch
    %9 = sbr.rel (0) target = $region5
  $region4: #{_lambda_.2} parent=0 // pred_region
    _
  $region5: #{_lambda_.2} parent=0 // pred_fallthru
    _
  // Predicated region
  $region6: #{_lambda_.2} parent=0 // pred_check
    _
  $region7: #{_lambda_.2} parent=0 // pred_check_branch
    %11 = sbr.rel (0) target = $region9
  $region8: #{_lambda_.2} parent=0 // pred_region
    _
  $region9: #{_lambda_.2} parent=0 // pred_fallthru
    _
  // Predicated region
  $region10: #{_lambda_.2} parent=0 // pred_check
    _
  $region11: #{_lambda_.2} parent=0 // pred_check_branch
    %13 = sbr.rel (0) target = $region13
  $region12: #{_lambda_.2} parent=0 // pred_region
    _
  $region13: #{_lambda_.2} parent=0 // pred_fallthru
    _
  %s15 = smul.u32 0, 8
  %s16 = smul.u32 %s15, 2
  %s17 = smul.addr %s16, 4
  %s18 = scalar_lea.vmem %s0, %s17
  %v19 = vld [vmem:[%s18] sm:$0xf]
  %v20 = vld [vmem:[%s18 + $0x8] sm:$0xf]
  %v21 = vld [vmem:[%s18 + $0x10] sm:$0xf]
  %v22 = vld [vmem:[%s18 + $0x18] sm:$0xf]
  %v23 = vld [vmem:[%s18 + $0x20] sm:$0xf]
  %v24 = vld [vmem:[%s18 + $0x28] sm:$0xf]
  %v25 = vld [vmem:[%s18 + $0x30] sm:$0xf]
  %v26 = vld [vmem:[%s18 + $0x38] sm:$0xf]
  %v27 = vld [vmem:[%s18 + $0x48] sm:$0xf]
  %v28 = vld [vmem:[%s18 + $0x50] sm:$0xf]
  %v29 = vld [vmem:[%s18 + $0x58] sm:$0xf]
  %v30 = vld [vmem:[%s18 + $0x60] sm:$0xf]
  %v31 = vld [vmem:[%s18 + $0x68] sm:$0xf]
  %v32 = vld [vmem:[%s18 + $0x70] sm:$0xf]
  %v33 = vld [vmem:[%s18 + $0x78] sm:$0xf]
  %v34 = vld [vmem:[%s18 + $0x80] sm:$0xf]
  %v35 = vld [vmem:[%s1] sm:$0xf]
  %v36 = vld [vmem:[%s1 + $0x4] sm:$0x3]
  %v37 = vld [vmem:[%s18 + $0x4] sm:$0x1]
  %v38 = vld [vmem:[%s18 + $0xc] sm:$0x1]
  %v39 = vld [vmem:[%s18 + $0x14] sm:$0x1]
  %v40 = vld [vmem:[%s18 + $0x1c] sm:$0x1]
  %v41 = vld [vmem:[%s18 + $0x24] sm:$0x1]
  %v42 = vld [vmem:[%s18 + $0x2c] sm:$0x1]
  %v43 = vld [vmem:[%s18 + $0x34] sm:$0x1]
  %v44 = vld [vmem:[%s18 + $0x3c] sm:$0x1]
  %v45 = vld [vmem:[%s18 + $0x4c] sm:$0x1]
  %v46 = vld [vmem:[%s18 + $0x54] sm:$0x1]
  %v47 = vld [vmem:[%s18 + $0x5c] sm:$0x1]
  %v48 = vld [vmem:[%s18 + $0x64] sm:$0x1]
  %v49 = vld [vmem:[%s18 + $0x6c] sm:$0x1]
  %v50 = vld [vmem:[%s18 + $0x74] sm:$0x1]
  %v51 = vld [vmem:[%s18 + $0x7c] sm:$0x1]
  %v52 = vld [vmem:[%s18 + $0x84] sm:$0x1]
  %vm53 = vsmask.f32 3328
  %vm54 = vsmask.f32 7440
  %vm55 = vmor %vm53, %vm54
  %v57 = vshrl.u32 %v19, 16
  %v59 = vrot.slane %v57, 4
  %v60 = vshll.u32 %v19, 16
  %v62 = vrot.slane %v60, 5
  %v63 = vor.u32 %v59, %v62
  %v64 = vrot.slane %v63, 4
  %v66 = vshll.u32 %v37, 16
  %v68 = vrot.slane %v66, 5
  %v69 = vsel %vm55, %v64, %v68
  %v71 = vshrl.u32 %v20, 16
  %v73 = vrot.slane %v71, 4
  %v74 = vshll.u32 %v20, 16
  %v76 = vrot.slane %v74, 5
  %v77 = vor.u32 %v73, %v76
  %v78 = vrot.slane %v77, 4
  %v80 = vshll.u32 %v38, 16
  %v82 = vrot.slane %v80, 5
  %v83 = vsel %vm55, %v78, %v82
  %v85 = vshrl.u32 %v21, 16
  %v87 = vrot.slane %v85, 4
  %v88 = vshll.u32 %v21, 16
  %v90 = vrot.slane %v88, 5
  %v91 = vor.u32 %v87, %v90
  %v92 = vrot.slane %v91, 4
  %v94 = vshll.u32 %v39, 16
  %v96 = vrot.slane %v94, 5
  %v97 = vsel %vm55, %v92, %v96
  %v99 = vshrl.u32 %v22, 16
  %v101 = vrot.slane %v99, 4
  %v102 = vshll.u32 %v22, 16
  %v104 = vrot.slane %v102, 5
  %v105 = vor.u32 %v101, %v104
  %v106 = vrot.slane %v105, 4
  %v108 = vshll.u32 %v40, 16
  %v110 = vrot.slane %v108, 5
  %v111 = vsel %vm55, %v106, %v110
  %v113 = vshrl.u32 %v23, 16
  %v115 = vrot.slane %v113, 4
  %v116 = vshll.u32 %v23, 16
  %v118 = vrot.slane %v116, 5
  %v119 = vor.u32 %v115, %v118
  %v120 = vrot.slane %v119, 4
  %v122 = vshll.u32 %v41, 16
  %v124 = vrot.slane %v122, 5
  %v125 = vsel %vm55, %v120, %v124
  %v127 = vshrl.u32 %v24, 16
  %v129 = vrot.slane %v127, 4
  %v130 = vshll.u32 %v24, 16
  %v132 = vrot.slane %v130, 5
  %v133 = vor.u32 %v129, %v132
  %v134 = vrot.slane %v133, 4
  %v136 = vshll.u32 %v42, 16
  %v138 = vrot.slane %v136, 5
  %v139 = vsel %vm55, %v134, %v138
  %v141 = vshrl.u32 %v25, 16
  %v143 = vrot.slane %v141, 4
  %v144 = vshll.u32 %v25, 16
  %v146 = vrot.slane %v144, 5
  %v147 = vor.u32 %v143, %v146
  %v148 = vrot.slane %v147, 4
  %v150 = vshll.u32 %v43, 16
  %v152 = vrot.slane %v150, 5
  %v153 = vsel %vm55, %v148, %v152
  %v155 = vshrl.u32 %v26, 16
  %v157 = vrot.slane %v155, 4
  %v158 = vshll.u32 %v26, 16
  %v160 = vrot.slane %v158, 5
  %v161 = vor.u32 %v157, %v160
  %v162 = vrot.slane %v161, 4
  %v164 = vshll.u32 %v44, 16
  %v166 = vrot.slane %v164, 5
  %v167 = vsel %vm55, %v162, %v166
  %v169 = vshrl.u32 %v27, 16
  %v171 = vrot.slane %v169, 4
  %v172 = vshll.u32 %v27, 16
  %v174 = vrot.slane %v172, 5
  %v175 = vor.u32 %v171, %v174
  %v176 = vrot.slane %v175, 4
  %v178 = vshll.u32 %v45, 16
  %v180 = vrot.slane %v178, 5
  %v181 = vsel %vm55, %v176, %v180
  %v183 = vshrl.u32 %v28, 16
  %v185 = vrot.slane %v183, 4
  %v186 = vshll.u32 %v28, 16
  %v188 = vrot.slane %v186, 5
  %v189 = vor.u32 %v185, %v188
  %v190 = vrot.slane %v189, 4
  %v192 = vshll.u32 %v46, 16
  %v194 = vrot.slane %v192, 5
  %v195 = vsel %vm55, %v190, %v194
  %v197 = vshrl.u32 %v29, 16
  %v199 = vrot.slane %v197, 4
  %v200 = vshll.u32 %v29, 16
  %v202 = vrot.slane %v200, 5
  %v203 = vor.u32 %v199, %v202
  %v204 = vrot.slane %v203, 4
  %v206 = vshll.u32 %v47, 16
  %v208 = vrot.slane %v206, 5
  %v209 = vsel %vm55, %v204, %v208
  %v211 = vshrl.u32 %v30, 16
  %v213 = vrot.slane %v211, 4
  %v214 = vshll.u32 %v30, 16
  %v216 = vrot.slane %v214, 5
  %v217 = vor.u32 %v213, %v216
  %v218 = vrot.slane %v217, 4
  %v220 = vshll.u32 %v48, 16
  %v222 = vrot.slane %v220, 5
  %v223 = vsel %vm55, %v218, %v222
  %v225 = vshrl.u32 %v31, 16
  %v227 = vrot.slane %v225, 4
  %v228 = vshll.u32 %v31, 16
  %v230 = vrot.slane %v228, 5
  %v231 = vor.u32 %v227, %v230
  %v232 = vrot.slane %v231, 4
  %v234 = vshll.u32 %v49, 16
  %v236 = vrot.slane %v234, 5
  %v237 = vsel %vm55, %v232, %v236
  %v239 = vshrl.u32 %v32, 16
  %v241 = vrot.slane %v239, 4
  %v242 = vshll.u32 %v32, 16
  %v244 = vrot.slane %v242, 5
  %v245 = vor.u32 %v241, %v244
  %v246 = vrot.slane %v245, 4
  %v248 = vshll.u32 %v50, 16
  %v250 = vrot.slane %v248, 5
  %v251 = vsel %vm55, %v246, %v250
  %v253 = vshrl.u32 %v33, 16
  %v255 = vrot.slane %v253, 4
  %v256 = vshll.u32 %v33, 16
  %v258 = vrot.slane %v256, 5
  %v259 = vor.u32 %v255, %v258
  %v260 = vrot.slane %v259, 4
  %v262 = vshll.u32 %v51, 16
  %v264 = vrot.slane %v262, 5
  %v265 = vsel %vm55, %v260, %v264
  %v267 = vshrl.u32 %v34, 16
  %v269 = vrot.slane %v267, 4
  %v270 = vshll.u32 %v34, 16
  %v272 = vrot.slane %v270, 5
  %v273 = vor.u32 %v269, %v272
  %v274 = vrot.slane %v273, 4
  %v276 = vshll.u32 %v52, 16
  %v278 = vrot.slane %v276, 5
  %v279 = vsel %vm55, %v274, %v278
  %s280 = scalar_lea.vmem %s1, 8
  %v281 = vld [vmem:[%s280] sm:$0xf]
  %v282 = vld [vmem:[%s280 + $0x4] sm:$0x3]
  %v283 = vunpack.c.l.b16 %v69
  %v284 = vunpack.c.l.b16 %v83
  %v285 = vunpack.c.l.b16 %v97
  %v286 = vunpack.c.l.b16 %v111
  %v287 = vunpack.c.l.b16 %v125
  %v288 = vunpack.c.l.b16 %v139
  %v289 = vunpack.c.l.b16 %v153
  %v290 = vunpack.c.l.b16 %v167
  %v291 = vunpack.c.l.b16 %v181
  %v292 = vunpack.c.l.b16 %v195
  %v293 = vunpack.c.l.b16 %v209
  %v294 = vunpack.c.l.b16 %v223
  %v295 = vunpack.c.l.b16 %v237
  %v296 = vunpack.c.l.b16 %v251
  %v297 = vunpack.c.l.b16 %v265
  %v298 = vunpack.c.l.b16 %v279
  %v299 = vpack.c.b16 %v284, %v283
  %v300 = vpack.c.b16 %v286, %v285
  %v301 = vpack.c.b16 %v288, %v287
  %v302 = vpack.c.b16 %v290, %v289
  %v303 = vpack.c.b16 %v292, %v291
  %v304 = vpack.c.b16 %v294, %v293
  %v305 = vpack.c.b16 %v296, %v295
  %v306 = vpack.c.b16 %v298, %v297
  %v309 = vunpack.c.l.b16 %v281
  %v310 = vunpack.c.l.b16 %v282
  %v311 = vpack.c.b16 %v310, %v309
  %vm312 = vcmask 97280
  %v314 = vsel %vm312, %v299, 0
  %v317 = vsel %vm312, %v300, 0
  %v320 = vsel %vm312, %v301, 0
  %v323 = vsel %vm312, %v302, 0
  %v326 = vsel %vm312, %v303, 0
  %v329 = vsel %vm312, %v304, 0
  %v332 = vsel %vm312, %v305, 0
  %v335 = vsel %vm312, %v306, 0
  %vm337 = vcmask 1045504
  %v339 = vsel %vm337, %v311, 0
  %341 = vmatprep.subr.bf16.mxu0 0
  %342 = vmatpush1.bf16.msra.mxu0 %v339
  %343 = vmatprep.subr.bf16.mxu0 0
  %344 = vmatpush1.bf16.msra.mxu0 0
  %345 = vmatprep.subr.bf16.mxu0 0
  %346 = vmatpush1.bf16.msra.mxu0 0
  %347 = vmatprep.subr.bf16.mxu0 0
  %348 = vmatpush1.bf16.msra.mxu0 0
  %349 = vmatprep.subr.bf16.mxu0 0
  %350 = vmatpush1.bf16.msra.mxu0 0
  %351 = vmatprep.subr.bf16.mxu0 0
  %352 = vmatpush1.bf16.msra.mxu0 0
  %353 = vmatprep.subr.bf16.mxu0 0
  %354 = vmatpush1.bf16.msra.mxu0 0
  %355 = vmatprep.subr.bf16.mxu0 0
  %356 = vmatpush1.bf16.msra.mxu0 0
  %357 = vmatprep.subr.bf16.mxu0 0
  %358 = vmatpush1.bf16.msra.mxu0 0
  %359 = vmatprep.subr.bf16.mxu0 0
  %360 = vmatpush1.bf16.msra.mxu0 0
  %361 = vmatprep.subr.bf16.mxu0 0
  %362 = vmatpush1.bf16.msra.mxu0 0
  %363 = vmatprep.subr.bf16.mxu0 0
  %364 = vmatpush1.bf16.msra.mxu0 0
  %365 = vmatprep.subr.bf16.mxu0 0
  %366 = vmatpush1.bf16.msra.mxu0 0
  %367 = vmatprep.subr.bf16.mxu0 0
  %368 = vmatpush1.bf16.msra.mxu0 0
  %369 = vmatprep.subr.bf16.mxu0 0
  %370 = vmatpush1.bf16.msra.mxu0 0
  %371 = vmatprep.subr.bf16.mxu0 0
  %372 = vmatpush1.bf16.msra.mxu0 0
  %373 = vmatprep.mubr.bf16.mxu0 0
  %374 = vmatmul.mubr.bf16.gmra.mrb[0].mxu0 %v314
  %v375 = vpop.f32.mrb[0].mxu0
  %v376 = vadd.f32 0.0, %v375
  %v377 = vpop.f32.mrb[0].mxu0
  %v378 = vpop.f32.mrb[0].mxu0
  %v379 = vadd.f32 0.0, %v378
  %v380 = vpop.f32.mrb[0].mxu0
  %381 = vmatprep.mubr.bf16.mxu0 0
  %382 = vmatmul.mubr.bf16.gmra.mrb[0].mxu0 %v317
  %v383 = vpop.f32.mrb[0].mxu0
  %v384 = vadd.f32 0.0, %v383
  %v385 = vpop.f32.mrb[0].mxu0
  %v386 = vpop.f32.mrb[0].mxu0
  %v387 = vadd.f32 0.0, %v386
  %v388 = vpop.f32.mrb[0].mxu0
  %389 = vmatprep.mubr.bf16.mxu0 0
  %390 = vmatmul.mubr.bf16.gmra.mrb[0].mxu0 %v320
  %v391 = vpop.f32.mrb[0].mxu0
  %v392 = vadd.f32 0.0, %v391
  %v393 = vpop.f32.mrb[0].mxu0
  %v394 = vpop.f32.mrb[0].mxu0
  %v395 = vadd.f32 0.0, %v394
  %v396 = vpop.f32.mrb[0].mxu0
  %397 = vmatprep.mubr.bf16.mxu0 0
  %398 = vmatmul.mubr.bf16.gmra.mrb[0].mxu0 %v323
  %v399 = vpop.f32.mrb[0].mxu0
  %v400 = vadd.f32 0.0, %v399
  %v401 = vpop.f32.mrb[0].mxu0
  %v402 = vpop.f32.mrb[0].mxu0
  %v403 = vadd.f32 0.0, %v402
  %v404 = vpop.f32.mrb[0].mxu0
  %405 = vmatprep.mubr.bf16.mxu0 0
  %406 = vmatmul.mubr.bf16.gmra.mrb[0].mxu0 %v326
  %v407 = vpop.f32.mrb[0].mxu0
  %v408 = vadd.f32 0.0, %v407
  %v409 = vpop.f32.mrb[0].mxu0
  %v410 = vpop.f32.mrb[0].mxu0
  %v411 = vadd.f32 0.0, %v410
  %v412 = vpop.f32.mrb[0].mxu0
  %413 = vmatprep.mubr.bf16.mxu0 0
  %414 = vmatmul.mubr.bf16.gmra.mrb[0].mxu0 %v329
  %v415 = vpop.f32.mrb[0].mxu0
  %v416 = vadd.f32 0.0, %v415
  %v417 = vpop.f32.mrb[0].mxu0
  %v418 = vpop.f32.mrb[0].mxu0
  %v419 = vadd.f32 0.0, %v418
  %v420 = vpop.f32.mrb[0].mxu0
  %421 = vmatprep.mubr.bf16.mxu0 0
  %422 = vmatmul.mubr.bf16.gmra.mrb[0].mxu0 %v332
  %v423 = vpop.f32.mrb[0].mxu0
  %v424 = vadd.f32 0.0, %v423
  %v425 = vpop.f32.mrb[0].mxu0
  %v426 = vpop.f32.mrb[0].mxu0
  %v427 = vadd.f32 0.0, %v426
  %v428 = vpop.f32.mrb[0].mxu0
  %429 = vmatprep.mubr.bf16.mxu0 0
  %430 = vmatmul.mubr.bf16.gmra.mrb[0].mxu0 %v335
  %v431 = vpop.f32.mrb[0].mxu0
  %v432 = vadd.f32 0.0, %v431
  %v433 = vpop.f32.mrb[0].mxu0
  %v434 = vpop.f32.mrb[0].mxu0
  %v435 = vadd.f32 0.0, %v434
  %v436 = vpop.f32.mrb[0].mxu0
  %437 = vdwg.mxu0
  %v454 = vunpack.c.l.b16 %v19
  %v455 = vunpack.c.l.b16 %v20
  %v456 = vunpack.c.l.b16 %v21
  %v457 = vunpack.c.l.b16 %v22
  %v458 = vunpack.c.l.b16 %v23
  %v459 = vunpack.c.l.b16 %v24
  %v460 = vunpack.c.l.b16 %v25
  %v461 = vunpack.c.l.b16 %v26
  %v462 = vunpack.c.l.b16 %v27
  %v463 = vunpack.c.l.b16 %v28
  %v464 = vunpack.c.l.b16 %v29
  %v465 = vunpack.c.l.b16 %v30
  %v466 = vunpack.c.l.b16 %v31
  %v467 = vunpack.c.l.b16 %v32
  %v468 = vunpack.c.l.b16 %v33
  %v469 = vunpack.c.l.b16 %v34
  %v470 = vpack.c.b16 %v455, %v454
  %v471 = vpack.c.b16 %v457, %v456
  %v472 = vpack.c.b16 %v459, %v458
  %v473 = vpack.c.b16 %v461, %v460
  %v474 = vpack.c.b16 %v463, %v462
  %v475 = vpack.c.b16 %v465, %v464
  %v476 = vpack.c.b16 %v467, %v466
  %v477 = vpack.c.b16 %v469, %v468
  %v480 = vunpack.c.l.b16 %v35
  %v481 = vunpack.c.l.b16 %v36
  %v482 = vpack.c.b16 %v481, %v480
  %v484 = vsel %vm312, %v470, 0
  %v487 = vsel %vm312, %v471, 0
  %v490 = vsel %vm312, %v472, 0
  %v493 = vsel %vm312, %v473, 0
  %v496 = vsel %vm312, %v474, 0
  %v499 = vsel %vm312, %v475, 0
  %v502 = vsel %vm312, %v476, 0
  %v505 = vsel %vm312, %v477, 0
  %v508 = vsel %vm337, %v482, 0
  %510 = vmatprep.subr.bf16.mxu0 0
  %511 = vmatpush1.bf16.msra.mxu0 %v508
  %512 = vmatprep.subr.bf16.mxu0 0
  %513 = vmatpush1.bf16.msra.mxu0 0
  %514 = vmatprep.subr.bf16.mxu0 0
  %515 = vmatpush1.bf16.msra.mxu0 0
  %516 = vmatprep.subr.bf16.mxu0 0
  %517 = vmatpush1.bf16.msra.mxu0 0
  %518 = vmatprep.subr.bf16.mxu0 0
  %519 = vmatpush1.bf16.msra.mxu0 0
  %520 = vmatprep.subr.bf16.mxu0 0
  %521 = vmatpush1.bf16.msra.mxu0 0
  %522 = vmatprep.subr.bf16.mxu0 0
  %523 = vmatpush1.bf16.msra.mxu0 0
  %524 = vmatprep.subr.bf16.mxu0 0
  %525 = vmatpush1.bf16.msra.mxu0 0
  %526 = vmatprep.subr.bf16.mxu0 0
  %527 = vmatpush1.bf16.msra.mxu0 0
  %528 = vmatprep.subr.bf16.mxu0 0
  %529 = vmatpush1.bf16.msra.mxu0 0
  %530 = vmatprep.subr.bf16.mxu0 0
  %531 = vmatpush1.bf16.msra.mxu0 0
  %532 = vmatprep.subr.bf16.mxu0 0
  %533 = vmatpush1.bf16.msra.mxu0 0
  %534 = vmatprep.subr.bf16.mxu0 0
  %535 = vmatpush1.bf16.msra.mxu0 0
  %536 = vmatprep.subr.bf16.mxu0 0
  %537 = vmatpush1.bf16.msra.mxu0 0
  %538 = vmatprep.subr.bf16.mxu0 0
  %539 = vmatpush1.bf16.msra.mxu0 0
  %540 = vmatprep.subr.bf16.mxu0 0
  %541 = vmatpush1.bf16.msra.mxu0 0
  %542 = vmatprep.mubr.bf16.mxu0 0
  %543 = vmatmul.mubr.bf16.gmra.mrb[0].mxu0 %v484
  %v544 = vpop.f32.mrb[0].mxu0
  %v545 = vadd.f32 %v376, %v544
  %v546 = vpop.f32.mrb[0].mxu0
  %v547 = vpop.f32.mrb[0].mxu0
  %v548 = vadd.f32 %v379, %v547
  %v549 = vpop.f32.mrb[0].mxu0
  %550 = vmatprep.mubr.bf16.mxu0 0
  %551 = vmatmul.mubr.bf16.gmra.mrb[0].mxu0 %v487
  %v552 = vpop.f32.mrb[0].mxu0
  %v553 = vadd.f32 %v384, %v552
  %v554 = vpop.f32.mrb[0].mxu0
  %v555 = vpop.f32.mrb[0].mxu0
  %v556 = vadd.f32 %v387, %v555
  %v557 = vpop.f32.mrb[0].mxu0
  %558 = vmatprep.mubr.bf16.mxu0 0
  %559 = vmatmul.mubr.bf16.gmra.mrb[0].mxu0 %v490
  %v560 = vpop.f32.mrb[0].mxu0
  %v561 = vadd.f32 %v392, %v560
  %v562 = vpop.f32.mrb[0].mxu0
  %v563 = vpop.f32.mrb[0].mxu0
  %v564 = vadd.f32 %v395, %v563
  %v565 = vpop.f32.mrb[0].mxu0
  %566 = vmatprep.mubr.bf16.mxu0 0
  %567 = vmatmul.mubr.bf16.gmra.mrb[0].mxu0 %v493
  %v568 = vpop.f32.mrb[0].mxu0
  %v569 = vadd.f32 %v400, %v568
  %v570 = vpop.f32.mrb[0].mxu0
  %v571 = vpop.f32.mrb[0].mxu0
  %v572 = vadd.f32 %v403, %v571
  %v573 = vpop.f32.mrb[0].mxu0
  %574 = vmatprep.mubr.bf16.mxu0 0
  %575 = vmatmul.mubr.bf16.gmra.mrb[0].mxu0 %v496
  %v576 = vpop.f32.mrb[0].mxu0
  %v577 = vadd.f32 %v408, %v576
  %v578 = vpop.f32.mrb[0].mxu0
  %v579 = vpop.f32.mrb[0].mxu0
  %v580 = vadd.f32 %v411, %v579
  %v581 = vpop.f32.mrb[0].mxu0
  %582 = vmatprep.mubr.bf16.mxu0 0
  %583 = vmatmul.mubr.bf16.gmra.mrb[0].mxu0 %v499
  %v584 = vpop.f32.mrb[0].mxu0
  %v585 = vadd.f32 %v416, %v584
  %v586 = vpop.f32.mrb[0].mxu0
  %v587 = vpop.f32.mrb[0].mxu0
  %v588 = vadd.f32 %v419, %v587
  %v589 = vpop.f32.mrb[0].mxu0
  %590 = vmatprep.mubr.bf16.mxu0 0
  %591 = vmatmul.mubr.bf16.gmra.mrb[0].mxu0 %v502
  %v592 = vpop.f32.mrb[0].mxu0
  %v593 = vadd.f32 %v424, %v592
  %v594 = vpop.f32.mrb[0].mxu0
  %v595 = vpop.f32.mrb[0].mxu0
  %v596 = vadd.f32 %v427, %v595
  %v597 = vpop.f32.mrb[0].mxu0
  %598 = vmatprep.mubr.bf16.mxu0 0
  %599 = vmatmul.mubr.bf16.gmra.mrb[0].mxu0 %v505
  %v600 = vpop.f32.mrb[0].mxu0
  %v601 = vadd.f32 %v432, %v600
  %v602 = vpop.f32.mrb[0].mxu0
  %v603 = vpop.f32.mrb[0].mxu0
  %v604 = vadd.f32 %v435, %v603
  %v605 = vpop.f32.mrb[0].mxu0
  %606 = vdwg.mxu0
  %s607 = sadd.s32 %s15, 1
  %s608 = smul.u32 %s607, 2
  %s609 = smul.addr %s608, 4
  %s610 = scalar_lea.vmem %s0, %s609
  %v611 = vld [vmem:[%s610] sm:$0xf]
  %v612 = vld [vmem:[%s610 + $0x8] sm:$0xf]
  %v613 = vld [vmem:[%s610 + $0x10] sm:$0xf]
  %v614 = vld [vmem:[%s610 + $0x18] sm:$0xf]
  %v615 = vld [vmem:[%s610 + $0x20] sm:$0xf]
  %v616 = vld [vmem:[%s610 + $0x28] sm:$0xf]
  %v617 = vld [vmem:[%s610 + $0x30] sm:$0xf]
  %v618 = vld [vmem:[%s610 + $0x38] sm:$0xf]
  %v619 = vld [vmem:[%s610 + $0x48] sm:$0xf]
  %v620 = vld [vmem:[%s610 + $0x50] sm:$0xf]
  %v621 = vld [vmem:[%s610 + $0x58] sm:$0xf]
  %v622 = vld [vmem:[%s610 + $0x60] sm:$0xf]
  %v623 = vld [vmem:[%s610 + $0x68] sm:$0xf]
  %v624 = vld [vmem:[%s610 + $0x70] sm:$0xf]
  %v625 = vld [vmem:[%s610 + $0x78] sm:$0xf]
  %v626 = vld [vmem:[%s610 + $0x80] sm:$0xf]
  %s627 = scalar_lea.vmem %s1, 16
  %v628 = vld [vmem:[%s627] sm:$0xf]
  %v629 = vld [vmem:[%s627 + $0x4] sm:$0x3]
  %v646 = vunpack.c.l.b16 %v611
  %v647 = vunpack.c.l.b16 %v612
  %v648 = vunpack.c.l.b16 %v613
  %v649 = vunpack.c.l.b16 %v614
  %v650 = vunpack.c.l.b16 %v615
  %v651 = vunpack.c.l.b16 %v616
  %v652 = vunpack.c.l.b16 %v617
  %v653 = vunpack.c.l.b16 %v618
  %v654 = vunpack.c.l.b16 %v619
  %v655 = vunpack.c.l.b16 %v620
  %v656 = vunpack.c.l.b16 %v621
  %v657 = vunpack.c.l.b16 %v622
  %v658 = vunpack.c.l.b16 %v623
  %v659 = vunpack.c.l.b16 %v624
  %v660 = vunpack.c.l.b16 %v625
  %v661 = vunpack.c.l.b16 %v626
  %v662 = vpack.c.b16 %v647, %v646
  %v663 = vpack.c.b16 %v649, %v648
  %v664 = vpack.c.b16 %v651, %v650
  %v665 = vpack.c.b16 %v653, %v652
  %v666 = vpack.c.b16 %v655, %v654
  %v667 = vpack.c.b16 %v657, %v656
  %v668 = vpack.c.b16 %v659, %v658
  %v669 = vpack.c.b16 %v661, %v660
  %v672 = vunpack.c.l.b16 %v628
  %v673 = vunpack.c.l.b16 %v629
  %v674 = vpack.c.b16 %v673, %v672
  %v676 = vsel %vm312, %v662, 0
  %v679 = vsel %vm312, %v663, 0
  %v682 = vsel %vm312, %v664, 0
  %v685 = vsel %vm312, %v665, 0
  %v688 = vsel %vm312, %v666, 0
  %v691 = vsel %vm312, %v667, 0
  %v694 = vsel %vm312, %v668, 0
  %v697 = vsel %vm312, %v669, 0
  %v700 = vsel %vm337, %v674, 0
  %702 = vmatprep.subr.bf16.mxu0 0
  %703 = vmatpush1.bf16.msra.mxu0 %v700
  %704 = vmatprep.subr.bf16.mxu0 0
  %705 = vmatpush1.bf16.msra.mxu0 0
  %706 = vmatprep.subr.bf16.mxu0 0
  %707 = vmatpush1.bf16.msra.mxu0 0
  %708 = vmatprep.subr.bf16.mxu0 0
  %709 = vmatpush1.bf16.msra.mxu0 0
  %710 = vmatprep.subr.bf16.mxu0 0
  %711 = vmatpush1.bf16.msra.mxu0 0
  %712 = vmatprep.subr.bf16.mxu0 0
  %713 = vmatpush1.bf16.msra.mxu0 0
  %714 = vmatprep.subr.bf16.mxu0 0
  %715 = vmatpush1.bf16.msra.mxu0 0
  %716 = vmatprep.subr.bf16.mxu0 0
  %717 = vmatpush1.bf16.msra.mxu0 0
  %718 = vmatprep.subr.bf16.mxu0 0
  %719 = vmatpush1.bf16.msra.mxu0 0
  %720 = vmatprep.subr.bf16.mxu0 0
  %721 = vmatpush1.bf16.msra.mxu0 0
  %722 = vmatprep.subr.bf16.mxu0 0
  %723 = vmatpush1.bf16.msra.mxu0 0
  %724 = vmatprep.subr.bf16.mxu0 0
  %725 = vmatpush1.bf16.msra.mxu0 0
  %726 = vmatprep.subr.bf16.mxu0 0
  %727 = vmatpush1.bf16.msra.mxu0 0
  %728 = vmatprep.subr.bf16.mxu0 0
  %729 = vmatpush1.bf16.msra.mxu0 0
  %730 = vmatprep.subr.bf16.mxu0 0
  %731 = vmatpush1.bf16.msra.mxu0 0
  %732 = vmatprep.subr.bf16.mxu0 0
  %733 = vmatpush1.bf16.msra.mxu0 0
  %734 = vmatprep.mubr.bf16.mxu0 0
  %735 = vmatmul.mubr.bf16.gmra.mrb[0].mxu0 %v676
  %v736 = vpop.f32.mrb[0].mxu0
  %v737 = vadd.f32 0.0, %v736
  %v738 = vpop.f32.mrb[0].mxu0
  %v739 = vpop.f32.mrb[0].mxu0
  %v740 = vadd.f32 0.0, %v739
  %v741 = vpop.f32.mrb[0].mxu0
  %742 = vmatprep.mubr.bf16.mxu0 0
  %743 = vmatmul.mubr.bf16.gmra.mrb[0].mxu0 %v679
  %v744 = vpop.f32.mrb[0].mxu0
  %v745 = vadd.f32 0.0, %v744
  %v746 = vpop.f32.mrb[0].mxu0
  %v747 = vpop.f32.mrb[0].mxu0
  %v748 = vadd.f32 0.0, %v747
  %v749 = vpop.f32.mrb[0].mxu0
  %750 = vmatprep.mubr.bf16.mxu0 0
  %751 = vmatmul.mubr.bf16.gmra.mrb[0].mxu0 %v682
  %v752 = vpop.f32.mrb[0].mxu0
  %v753 = vadd.f32 0.0, %v752
  %v754 = vpop.f32.mrb[0].mxu0
  %v755 = vpop.f32.mrb[0].mxu0
  %v756 = vadd.f32 0.0, %v755
  %v757 = vpop.f32.mrb[0].mxu0
  %758 = vmatprep.mubr.bf16.mxu0 0
  %759 = vmatmul.mubr.bf16.gmra.mrb[0].mxu0 %v685
  %v760 = vpop.f32.mrb[0].mxu0
  %v761 = vadd.f32 0.0, %v760
  %v762 = vpop.f32.mrb[0].mxu0
  %v763 = vpop.f32.mrb[0].mxu0
  %v764 = vadd.f32 0.0, %v763
  %v765 = vpop.f32.mrb[0].mxu0
  %766 = vmatprep.mubr.bf16.mxu0 0
  %767 = vmatmul.mubr.bf16.gmra.mrb[0].mxu0 %v688
  %v768 = vpop.f32.mrb[0].mxu0
  %v769 = vadd.f32 0.0, %v768
  %v770 = vpop.f32.mrb[0].mxu0
  %v771 = vpop.f32.mrb[0].mxu0
  %v772 = vadd.f32 0.0, %v771
  %v773 = vpop.f32.mrb[0].mxu0
  %774 = vmatprep.mubr.bf16.mxu0 0
  %775 = vmatmul.mubr.bf16.gmra.mrb[0].mxu0 %v691
  %v776 = vpop.f32.mrb[0].mxu0
  %v777 = vadd.f32 0.0, %v776
  %v778 = vpop.f32.mrb[0].mxu0
  %v779 = vpop.f32.mrb[0].mxu0
  %v780 = vadd.f32 0.0, %v779
  %v781 = vpop.f32.mrb[0].mxu0
  %782 = vmatprep.mubr.bf16.mxu0 0
  %783 = vmatmul.mubr.bf16.gmra.mrb[0].mxu0 %v694
  %v784 = vpop.f32.mrb[0].mxu0
  %v785 = vadd.f32 0.0, %v784
  %v786 = vpop.f32.mrb[0].mxu0
  %v787 = vpop.f32.mrb[0].mxu0
  %v788 = vadd.f32 0.0, %v787
  %v789 = vpop.f32.mrb[0].mxu0
  %790 = vmatprep.mubr.bf16.mxu0 0
  %791 = vmatmul.mubr.bf16.gmra.mrb[0].mxu0 %v697
  %v792 = vpop.f32.mrb[0].mxu0
  %v793 = vadd.f32 0.0, %v792
  %v794 = vpop.f32.mrb[0].mxu0
  %v795 = vpop.f32.mrb[0].mxu0
  %v796 = vadd.f32 0.0, %v795
  %v797 = vpop.f32.mrb[0].mxu0
  %798 = vdwg.mxu0
  %v799 = vadd.f32 %v545, %v737
  %v800 = vadd.f32 %v548, %v740
  %v801 = vadd.f32 %v553, %v745
  %v802 = vadd.f32 %v556, %v748
  %v803 = vadd.f32 %v561, %v753
  %v804 = vadd.f32 %v564, %v756
  %v805 = vadd.f32 %v569, %v761
  %v806 = vadd.f32 %v572, %v764
  %v807 = vadd.f32 %v577, %v769
  %v808 = vadd.f32 %v580, %v772
  %v809 = vadd.f32 %v585, %v777
  %v810 = vadd.f32 %v588, %v780
  %v811 = vadd.f32 %v593, %v785
  %v812 = vadd.f32 %v596, %v788
  %v813 = vadd.f32 %v601, %v793
  %v814 = vadd.f32 %v604, %v796
  %v815 = vld [vmem:[%s610] sm:$0xf]
  %v816 = vld [vmem:[%s610 + $0x4] sm:$0x1]
  %v817 = vld [vmem:[%s610 + $0x8] sm:$0xf]
  %v818 = vld [vmem:[%s610 + $0xc] sm:$0x1]
  %v819 = vld [vmem:[%s610 + $0x10] sm:$0xf]
  %v820 = vld [vmem:[%s610 + $0x14] sm:$0x1]
  %v821 = vld [vmem:[%s610 + $0x18] sm:$0xf]
  %v822 = vld [vmem:[%s610 + $0x1c] sm:$0x1]
  %v823 = vld [vmem:[%s610 + $0x20] sm:$0xf]
  %v824 = vld [vmem:[%s610 + $0x24] sm:$0x1]
  %v825 = vld [vmem:[%s610 + $0x28] sm:$0xf]
  %v826 = vld [vmem:[%s610 + $0x2c] sm:$0x1]
  %v827 = vld [vmem:[%s610 + $0x30] sm:$0xf]
  %v828 = vld [vmem:[%s610 + $0x34] sm:$0x1]
  %v829 = vld [vmem:[%s610 + $0x38] sm:$0xf]
  %v830 = vld [vmem:[%s610 + $0x3c] sm:$0x1]
  %v831 = vld [vmem:[%s610 + $0x48] sm:$0xf]
  %v832 = vld [vmem:[%s610 + $0x4c] sm:$0x1]
  %v833 = vld [vmem:[%s610 + $0x50] sm:$0xf]
  %v834 = vld [vmem:[%s610 + $0x54] sm:$0x1]
  %v835 = vld [vmem:[%s610 + $0x58] sm:$0xf]
  %v836 = vld [vmem:[%s610 + $0x5c] sm:$0x1]
  %v837 = vld [vmem:[%s610 + $0x60] sm:$0xf]
  %v838 = vld [vmem:[%s610 + $0x64] sm:$0x1]
  %v839 = vld [vmem:[%s610 + $0x68] sm:$0xf]
  %v840 = vld [vmem:[%s610 + $0x6c] sm:$0x1]
  %v841 = vld [vmem:[%s610 + $0x70] sm:$0xf]
  %v842 = vld [vmem:[%s610 + $0x74] sm:$0x1]
  %v843 = vld [vmem:[%s610 + $0x78] sm:$0xf]
  %v844 = vld [vmem:[%s610 + $0x7c] sm:$0x1]
  %v845 = vld [vmem:[%s610 + $0x80] sm:$0xf]
  %v846 = vld [vmem:[%s610 + $0x84] sm:$0x1]
  %v848 = vshrl.u32 %v815, 16
  %v850 = vrot.slane %v848, 4
  %v851 = vshll.u32 %v815, 16
  %v853 = vrot.slane %v851, 5
  %v854 = vor.u32 %v850, %v853
  %v855 = vrot.slane %v854, 4
  %v857 = vshll.u32 %v816, 16
  %v859 = vrot.slane %v857, 5
  %v860 = vsel %vm55, %v855, %v859
  %v862 = vshrl.u32 %v817, 16
  %v864 = vrot.slane %v862, 4
  %v865 = vshll.u32 %v817, 16
  %v867 = vrot.slane %v865, 5
  %v868 = vor.u32 %v864, %v867
  %v869 = vrot.slane %v868, 4
  %v871 = vshll.u32 %v818, 16
  %v873 = vrot.slane %v871, 5
  %v874 = vsel %vm55, %v869, %v873
  %v876 = vshrl.u32 %v819, 16
  %v878 = vrot.slane %v876, 4
  %v879 = vshll.u32 %v819, 16
  %v881 = vrot.slane %v879, 5
  %v882 = vor.u32 %v878, %v881
  %v883 = vrot.slane %v882, 4
  %v885 = vshll.u32 %v820, 16
  %v887 = vrot.slane %v885, 5
  %v888 = vsel %vm55, %v883, %v887
  %v890 = vshrl.u32 %v821, 16
  %v892 = vrot.slane %v890, 4
  %v893 = vshll.u32 %v821, 16
  %v895 = vrot.slane %v893, 5
  %v896 = vor.u32 %v892, %v895
  %v897 = vrot.slane %v896, 4
  %v899 = vshll.u32 %v822, 16
  %v901 = vrot.slane %v899, 5
  %v902 = vsel %vm55, %v897, %v901
  %v904 = vshrl.u32 %v823, 16
  %v906 = vrot.slane %v904, 4
  %v907 = vshll.u32 %v823, 16
  %v909 = vrot.slane %v907, 5
  %v910 = vor.u32 %v906, %v909
  %v911 = vrot.slane %v910, 4
  %v913 = vshll.u32 %v824, 16
  %v915 = vrot.slane %v913, 5
  %v916 = vsel %vm55, %v911, %v915
  %v918 = vshrl.u32 %v825, 16
  %v920 = vrot.slane %v918, 4
  %v921 = vshll.u32 %v825, 16
  %v923 = vrot.slane %v921, 5
  %v924 = vor.u32 %v920, %v923
  %v925 = vrot.slane %v924, 4
  %v927 = vshll.u32 %v826, 16
  %v929 = vrot.slane %v927, 5
  %v930 = vsel %vm55, %v925, %v929
  %v932 = vshrl.u32 %v827, 16
  %v934 = vrot.slane %v932, 4
  %v935 = vshll.u32 %v827, 16
  %v937 = vrot.slane %v935, 5
  %v938 = vor.u32 %v934, %v937
  %v939 = vrot.slane %v938, 4
  %v941 = vshll.u32 %v828, 16
  %v943 = vrot.slane %v941, 5
  %v944 = vsel %vm55, %v939, %v943
  %v946 = vshrl.u32 %v829, 16
  %v948 = vrot.slane %v946, 4
  %v949 = vshll.u32 %v829, 16
  %v951 = vrot.slane %v949, 5
  %v952 = vor.u32 %v948, %v951
  %v953 = vrot.slane %v952, 4
  %v955 = vshll.u32 %v830, 16
  %v957 = vrot.slane %v955, 5
  %v958 = vsel %vm55, %v953, %v957
  %v960 = vshrl.u32 %v831, 16
  %v962 = vrot.slane %v960, 4
  %v963 = vshll.u32 %v831, 16
  %v965 = vrot.slane %v963, 5
  %v966 = vor.u32 %v962, %v965
  %v967 = vrot.slane %v966, 4
  %v969 = vshll.u32 %v832, 16
  %v971 = vrot.slane %v969, 5
  %v972 = vsel %vm55, %v967, %v971
  %v974 = vshrl.u32 %v833, 16
  %v976 = vrot.slane %v974, 4
  %v977 = vshll.u32 %v833, 16
  %v979 = vrot.slane %v977, 5
  %v980 = vor.u32 %v976, %v979
  %v981 = vrot.slane %v980, 4
  %v983 = vshll.u32 %v834, 16
  %v985 = vrot.slane %v983, 5
  %v986 = vsel %vm55, %v981, %v985
  %v988 = vshrl.u32 %v835, 16
  %v990 = vrot.slane %v988, 4
  %v991 = vshll.u32 %v835, 16
  %v993 = vrot.slane %v991, 5
  %v994 = vor.u32 %v990, %v993
  %v995 = vrot.slane %v994, 4
  %v997 = vshll.u32 %v836, 16
  %v999 = vrot.slane %v997, 5
  %v1000 = vsel %vm55, %v995, %v999
  %v1002 = vshrl.u32 %v837, 16
  %v1004 = vrot.slane %v1002, 4
  %v1005 = vshll.u32 %v837, 16
  %v1007 = vrot.slane %v1005, 5
  %v1008 = vor.u32 %v1004, %v1007
  %v1009 = vrot.slane %v1008, 4
  %v1011 = vshll.u32 %v838, 16
  %v1013 = vrot.slane %v1011, 5
  %v1014 = vsel %vm55, %v1009, %v1013
  %v1016 = vshrl.u32 %v839, 16
  %v1018 = vrot.slane %v1016, 4
  %v1019 = vshll.u32 %v839, 16
  %v1021 = vrot.slane %v1019, 5
  %v1022 = vor.u32 %v1018, %v1021
  %v1023 = vrot.slane %v1022, 4
  %v1025 = vshll.u32 %v840, 16
  %v1027 = vrot.slane %v1025, 5
  %v1028 = vsel %vm55, %v1023, %v1027
  %v1030 = vshrl.u32 %v841, 16
  %v1032 = vrot.slane %v1030, 4
  %v1033 = vshll.u32 %v841, 16
  %v1035 = vrot.slane %v1033, 5
  %v1036 = vor.u32 %v1032, %v1035
  %v1037 = vrot.slane %v1036, 4
  %v1039 = vshll.u32 %v842, 16
  %v1041 = vrot.slane %v1039, 5
  %v1042 = vsel %vm55, %v1037, %v1041
  %v1044 = vshrl.u32 %v843, 16
  %v1046 = vrot.slane %v1044, 4
  %v1047 = vshll.u32 %v843, 16
  %v1049 = vrot.slane %v1047, 5
  %v1050 = vor.u32 %v1046, %v1049
  %v1051 = vrot.slane %v1050, 4
  %v1053 = vshll.u32 %v844, 16
  %v1055 = vrot.slane %v1053, 5
  %v1056 = vsel %vm55, %v1051, %v1055
  %v1058 = vshrl.u32 %v845, 16
  %v1060 = vrot.slane %v1058, 4
  %v1061 = vshll.u32 %v845, 16
  %v1063 = vrot.slane %v1061, 5
  %v1064 = vor.u32 %v1060, %v1063
  %v1065 = vrot.slane %v1064, 4
  %v1067 = vshll.u32 %v846, 16
  %v1069 = vrot.slane %v1067, 5
  %v1070 = vsel %vm55, %v1065, %v1069
  %s1071 = scalar_lea.vmem %s1, 24
  %v1072 = vld [vmem:[%s1071] sm:$0xf]
  %v1073 = vld [vmem:[%s1071 + $0x4] sm:$0x3]
  %v1074 = vunpack.c.l.b16 %v860
  %v1075 = vunpack.c.l.b16 %v874
  %v1076 = vunpack.c.l.b16 %v888
  %v1077 = vunpack.c.l.b16 %v902
  %v1078 = vunpack.c.l.b16 %v916
  %v1079 = vunpack.c.l.b16 %v930
  %v1080 = vunpack.c.l.b16 %v944
  %v1081 = vunpack.c.l.b16 %v958
  %v1082 = vunpack.c.l.b16 %v972
  %v1083 = vunpack.c.l.b16 %v986
  %v1084 = vunpack.c.l.b16 %v1000
  %v1085 = vunpack.c.l.b16 %v1014
  %v1086 = vunpack.c.l.b16 %v1028
  %v1087 = vunpack.c.l.b16 %v1042
  %v1088 = vunpack.c.l.b16 %v1056
  %v1089 = vunpack.c.l.b16 %v1070
  %v1090 = vpack.c.b16 %v1075, %v1074
  %v1091 = vpack.c.b16 %v1077, %v1076
  %v1092 = vpack.c.b16 %v1079, %v1078
  %v1093 = vpack.c.b16 %v1081, %v1080
  %v1094 = vpack.c.b16 %v1083, %v1082
  %v1095 = vpack.c.b16 %v1085, %v1084
  %v1096 = vpack.c.b16 %v1087, %v1086
  %v1097 = vpack.c.b16 %v1089, %v1088
  %v1100 = vunpack.c.l.b16 %v1072
  %v1101 = vunpack.c.l.b16 %v1073
  %v1102 = vpack.c.b16 %v1101, %v1100
  %v1104 = vsel %vm312, %v1090, 0
  %v1107 = vsel %vm312, %v1091, 0
  %v1110 = vsel %vm312, %v1092, 0
  %v1113 = vsel %vm312, %v1093, 0
  %v1116 = vsel %vm312, %v1094, 0
  %v1119 = vsel %vm312, %v1095, 0
  %v1122 = vsel %vm312, %v1096, 0
  %v1125 = vsel %vm312, %v1097, 0
  %v1128 = vsel %vm337, %v1102, 0
  %1130 = vmatprep.subr.bf16.mxu0 0
  %1131 = vmatpush1.bf16.msra.mxu0 %v1128
  %1132 = vmatprep.subr.bf16.mxu0 0
  %1133 = vmatpush1.bf16.msra.mxu0 0
  %1134 = vmatprep.subr.bf16.mxu0 0
  %1135 = vmatpush1.bf16.msra.mxu0 0
  %1136 = vmatprep.subr.bf16.mxu0 0
  %1137 = vmatpush1.bf16.msra.mxu0 0
  %1138 = vmatprep.subr.bf16.mxu0 0
  %1139 = vmatpush1.bf16.msra.mxu0 0
  %1140 = vmatprep.subr.bf16.mxu0 0
  %1141 = vmatpush1.bf16.msra.mxu0 0
  %1142 = vmatprep.subr.bf16.mxu0 0
  %1143 = vmatpush1.bf16.msra.mxu0 0
  %1144 = vmatprep.subr.bf16.mxu0 0
  %1145 = vmatpush1.bf16.msra.mxu0 0
  %1146 = vmatprep.subr.bf16.mxu0 0
  %1147 = vmatpush1.bf16.msra.mxu0 0
  %1148 = vmatprep.subr.bf16.mxu0 0
  %1149 = vmatpush1.bf16.msra.mxu0 0
  %1150 = vmatprep.subr.bf16.mxu0 0
  %1151 = vmatpush1.bf16.msra.mxu0 0
  %1152 = vmatprep.subr.bf16.mxu0 0
  %1153 = vmatpush1.bf16.msra.mxu0 0
  %1154 = vmatprep.subr.bf16.mxu0 0
  %1155 = vmatpush1.bf16.msra.mxu0 0
  %1156 = vmatprep.subr.bf16.mxu0 0
  %1157 = vmatpush1.bf16.msra.mxu0 0
  %1158 = vmatprep.subr.bf16.mxu0 0
  %1159 = vmatpush1.bf16.msra.mxu0 0
  %1160 = vmatprep.subr.bf16.mxu0 0
  %1161 = vmatpush1.bf16.msra.mxu0 0
  %1162 = vmatprep.mubr.bf16.mxu0 0
  %1163 = vmatmul.mubr.bf16.gmra.mrb[0].mxu0 %v1104
  %v1164 = vpop.f32.mrb[0].mxu0
  %v1165 = vadd.f32 0.0, %v1164
  %v1166 = vpop.f32.mrb[0].mxu0
  %v1167 = vpop.f32.mrb[0].mxu0
  %v1168 = vadd.f32 0.0, %v1167
  %v1169 = vpop.f32.mrb[0].mxu0
  %1170 = vmatprep.mubr.bf16.mxu0 0
  %1171 = vmatmul.mubr.bf16.gmra.mrb[0].mxu0 %v1107
  %v1172 = vpop.f32.mrb[0].mxu0
  %v1173 = vadd.f32 0.0, %v1172
  %v1174 = vpop.f32.mrb[0].mxu0
  %v1175 = vpop.f32.mrb[0].mxu0
  %v1176 = vadd.f32 0.0, %v1175
  %v1177 = vpop.f32.mrb[0].mxu0
  %1178 = vmatprep.mubr.bf16.mxu0 0
  %1179 = vmatmul.mubr.bf16.gmra.mrb[0].mxu0 %v1110
  %v1180 = vpop.f32.mrb[0].mxu0
  %v1181 = vadd.f32 0.0, %v1180
  %v1182 = vpop.f32.mrb[0].mxu0
  %v1183 = vpop.f32.mrb[0].mxu0
  %v1184 = vadd.f32 0.0, %v1183
  %v1185 = vpop.f32.mrb[0].mxu0
  %1186 = vmatprep.mubr.bf16.mxu0 0
  %1187 = vmatmul.mubr.bf16.gmra.mrb[0].mxu0 %v1113
  %v1188 = vpop.f32.mrb[0].mxu0
  %v1189 = vadd.f32 0.0, %v1188
  %v1190 = vpop.f32.mrb[0].mxu0
  %v1191 = vpop.f32.mrb[0].mxu0
  %v1192 = vadd.f32 0.0, %v1191
  %v1193 = vpop.f32.mrb[0].mxu0
  %1194 = vmatprep.mubr.bf16.mxu0 0
  %1195 = vmatmul.mubr.bf16.gmra.mrb[0].mxu0 %v1116
  %v1196 = vpop.f32.mrb[0].mxu0
  %v1197 = vadd.f32 0.0, %v1196
  %v1198 = vpop.f32.mrb[0].mxu0
  %v1199 = vpop.f32.mrb[0].mxu0
  %v1200 = vadd.f32 0.0, %v1199
  %v1201 = vpop.f32.mrb[0].mxu0
  %1202 = vmatprep.mubr.bf16.mxu0 0
  %1203 = vmatmul.mubr.bf16.gmra.mrb[0].mxu0 %v1119
  %v1204 = vpop.f32.mrb[0].mxu0
  %v1205 = vadd.f32 0.0, %v1204
  %v1206 = vpop.f32.mrb[0].mxu0
  %v1207 = vpop.f32.mrb[0].mxu0
  %v1208 = vadd.f32 0.0, %v1207
  %v1209 = vpop.f32.mrb[0].mxu0
  %1210 = vmatprep.mubr.bf16.mxu0 0
  %1211 = vmatmul.mubr.bf16.gmra.mrb[0].mxu0 %v1122
  %v1212 = vpop.f32.mrb[0].mxu0
  %v1213 = vadd.f32 0.0, %v1212
  %v1214 = vpop.f32.mrb[0].mxu0
  %v1215 = vpop.f32.mrb[0].mxu0
  %v1216 = vadd.f32 0.0, %v1215
  %v1217 = vpop.f32.mrb[0].mxu0
  %1218 = vmatprep.mubr.bf16.mxu0 0
  %1219 = vmatmul.mubr.bf16.gmra.mrb[0].mxu0 %v1125
  %v1220 = vpop.f32.mrb[0].mxu0
  %v1221 = vadd.f32 0.0, %v1220
  %v1222 = vpop.f32.mrb[0].mxu0
  %v1223 = vpop.f32.mrb[0].mxu0
  %v1224 = vadd.f32 0.0, %v1223
  %v1225 = vpop.f32.mrb[0].mxu0
  %1226 = vdwg.mxu0
  %v1227 = vadd.f32 %v799, %v1165
  %v1228 = vadd.f32 %v800, %v1168
  %v1229 = vadd.f32 %v801, %v1173
  %v1230 = vadd.f32 %v802, %v1176
  %v1231 = vadd.f32 %v803, %v1181
  %v1232 = vadd.f32 %v804, %v1184
  %v1233 = vadd.f32 %v805, %v1189
  %v1234 = vadd.f32 %v806, %v1192
  %v1235 = vadd.f32 %v807, %v1197
  %v1236 = vadd.f32 %v808, %v1200
  %v1237 = vadd.f32 %v809, %v1205
  %v1238 = vadd.f32 %v810, %v1208
  %v1239 = vadd.f32 %v811, %v1213
  %v1240 = vadd.f32 %v812, %v1216
  %v1241 = vadd.f32 %v813, %v1221
  %v1242 = vadd.f32 %v814, %v1224
  %v1243 = vld [vmem:[%s2] sm:$0x1]
  %v1245 = vlaneseq
  %v1246 = vshrl.u32 %v1245, 7
  %v1247 = vsub.s32 0, %v1246
  %v1248 = vrot.slane %v1243, %v1247
  %v1250 = vadd.f32 %v1227, %v1248
  %v1251 = vadd.f32 %v1228, %v1248
  %v1252 = vadd.f32 %v1229, %v1248
  %v1253 = vadd.f32 %v1230, %v1248
  %v1254 = vadd.f32 %v1231, %v1248
  %v1255 = vadd.f32 %v1232, %v1248
  %v1256 = vadd.f32 %v1233, %v1248
  %v1257 = vadd.f32 %v1234, %v1248
  %v1258 = vadd.f32 %v1235, %v1248
  %v1259 = vadd.f32 %v1236, %v1248
  %v1260 = vadd.f32 %v1237, %v1248
  %v1261 = vadd.f32 %v1238, %v1248
  %v1262 = vadd.f32 %v1239, %v1248
  %v1263 = vadd.f32 %v1240, %v1248
  %v1264 = vadd.f32 %v1241, %v1248
  %v1265 = vadd.f32 %v1242, %v1248
  %v1266 = vmax.f32 %v1250, 0.0
  %v1267 = vmax.f32 %v1251, 0.0
  %v1268 = vmax.f32 %v1252, 0.0
  %v1269 = vmax.f32 %v1253, 0.0
  %v1270 = vmax.f32 %v1254, 0.0
  %v1271 = vmax.f32 %v1255, 0.0
  %v1272 = vmax.f32 %v1256, 0.0
  %v1273 = vmax.f32 %v1257, 0.0
  %v1274 = vmax.f32 %v1258, 0.0
  %v1275 = vmax.f32 %v1259, 0.0
  %v1276 = vmax.f32 %v1260, 0.0
  %v1277 = vmax.f32 %v1261, 0.0
  %v1278 = vmax.f32 %v1262, 0.0
  %v1279 = vmax.f32 %v1263, 0.0
  %v1280 = vmax.f32 %v1264, 0.0
  %v1281 = vmax.f32 %v1265, 0.0
  %v1282 = vpack.c.bf16 %v1266, %v1266
  %v1283 = vpack.c.bf16 %v1267, %v1267
  %v1284 = vpack.c.bf16 %v1268, %v1268
  %v1285 = vpack.c.bf16 %v1269, %v1269
  %v1286 = vpack.c.bf16 %v1270, %v1270
  %v1287 = vpack.c.bf16 %v1271, %v1271
  %v1288 = vpack.c.bf16 %v1272, %v1272
  %v1289 = vpack.c.bf16 %v1273, %v1273
  %v1290 = vpack.c.bf16 %v1274, %v1274
  %v1291 = vpack.c.bf16 %v1275, %v1275
  %v1292 = vpack.c.bf16 %v1276, %v1276
  %v1293 = vpack.c.bf16 %v1277, %v1277
  %v1294 = vpack.c.bf16 %v1278, %v1278
  %v1295 = vpack.c.bf16 %v1279, %v1279
  %v1296 = vpack.c.bf16 %v1280, %v1280
  %v1297 = vpack.c.bf16 %v1281, %v1281
  %1298 = vst [vmem:[%s3] sm:$0xf] %v1282
  %1299 = vst [vmem:[%s3 + $0x4] sm:$0xf] %v1283
  %1300 = vst [vmem:[%s3 + $0x8] sm:$0xf] %v1284
  %1301 = vst [vmem:[%s3 + $0xc] sm:$0xf] %v1285
  %1302 = vst [vmem:[%s3 + $0x10] sm:$0xf] %v1286
  %1303 = vst [vmem:[%s3 + $0x14] sm:$0xf] %v1287
  %1304 = vst [vmem:[%s3 + $0x18] sm:$0xf] %v1288
  %1305 = vst [vmem:[%s3 + $0x1c] sm:$0xf] %v1289
  %1306 = vst [vmem:[%s3 + $0x20] sm:$0xf] %v1290
  %1307 = vst [vmem:[%s3 + $0x24] sm:$0xf] %v1291
  %1308 = vst [vmem:[%s3 + $0x28] sm:$0xf] %v1292
  %1309 = vst [vmem:[%s3 + $0x2c] sm:$0xf] %v1293
  %1310 = vst [vmem:[%s3 + $0x30] sm:$0xf] %v1294
  %1311 = vst [vmem:[%s3 + $0x34] sm:$0xf] %v1295
  %1312 = vst [vmem:[%s3 + $0x38] sm:$0xf] %v1296
  %1313 = vst [vmem:[%s3 + $0x3c] sm:$0xf] %v1297
  // Predicated region
  $region14: #{_lambda_.2} parent=0 // pred_check
    _
  $region15: #{_lambda_.2} parent=0 // pred_check_branch
    %1315 = sbr.rel (0) target = $region17
  $region16: #{_lambda_.2} parent=0 // pred_region
    _
  $region17: #{_lambda_.2} parent=0 // pred_fallthru
    _
  // Predicated region
  $region18: #{_lambda_.2} parent=0 // pred_check
    _
  $region19: #{_lambda_.2} parent=0 // pred_check_branch
    %1317 = sbr.rel (0) target = $region21
  $region20: #{_lambda_.2} parent=0 // pred_region
    _
  $region21: #{_lambda_.2} parent=0 // pred_fallthru
    _

// kernel: _lambda_.3
$region0: #{_lambda_.3}
  #allocation0 [shape = 'u32[]', space=smem, size = 0x4, offset = 0x4, fixed_abs, tag = 'smem constant byte address 0x4 - core index']
  #allocation1 [shape = 'u32[144,128]{1,0:T(1,128)}', space=vmem, size = 0x12000, scoped, tag = 'internal scratch']
  %s0 = inlined_call_operand.vmem [shape: bf16[2,5,5,128], index: 0, kind: input, shape index: {}]
  %s1 = inlined_call_operand.vmem [shape: bf16[2,2,128,128], index: 1, kind: input, shape index: {}]
  %s2 = inlined_call_operand.vmem [shape: f32[1,128], index: 2, kind: input, shape index: {}]
  %s3 = inlined_call_operand.hbm [shape: f32[2,4,4,128], index: 3, kind: output, shape index: {}]
  %s4 = sld [smem:[#allocation0]]
  $region22: #{_lambda_.3} parent=0
    _
  %s6 = ssub.s32 1, %s4
  %s7 = scalar_select 0, %s6, %s4
  $region1: #{_lambda_.3} parent=0
    #allocation2 [shape = 'u8[16384]{0}', space=vmem, size = 0x4000, scoped, tag = 'output window, operand 0, single buffered']
    #allocation3 [shape = 's32[1]{0}', space=sflag, size = 0x4, scoped, tag = 'scoped memory for _lambda_.3']
    %8 = vsyncpa [#allocation3], 0
    // Predicated region
    $region2: #{_lambda_.3} parent=1 // pred_check
      _
    $region3: #{_lambda_.3} parent=1 // pred_check_branch
      %10 = sbr.rel (0) target = $region5
    $region4: #{_lambda_.3} parent=1 // pred_region
      _
    $region5: #{_lambda_.3} parent=1 // pred_fallthru
      _
    // Predicated region
    $region6: #{_lambda_.3} parent=1 // pred_check
      _
    $region7: #{_lambda_.3} parent=1 // pred_check_branch
      %12 = sbr.rel (0) target = $region9
    $region8: #{_lambda_.3} parent=1 // pred_region
      _
    $region9: #{_lambda_.3} parent=1 // pred_fallthru
      _
    // Predicated region
    $region10: #{_lambda_.3} parent=1 // pred_check
      _
    $region11: #{_lambda_.3} parent=1 // pred_check_branch
      %14 = sbr.rel (0) target = $region13
    $region12: #{_lambda_.3} parent=1 // pred_region
      _
    $region13: #{_lambda_.3} parent=1 // pred_fallthru
      _
    %s16 = smul.u32 0, 4
    %s17 = smul.addr %s16, 4
    %s18 = scalar_lea.vmem %s0, %s17
    %v19 = vld [vmem:[%s18] sm:$0x3]
    %v20 = vld [vmem:[%s18 + $0x4] sm:$0x3]
    %v21 = vld [vmem:[%s18 + $0x8] sm:$0x3]
    %v22 = vld [vmem:[%s18 + $0xc] sm:$0x3]
    %v23 = vld [vmem:[%s18 + $0x14] sm:$0x3]
    %v24 = vld [vmem:[%s18 + $0x18] sm:$0x3]
    %v25 = vld [vmem:[%s18 + $0x1c] sm:$0x3]
    %v26 = vld [vmem:[%s18 + $0x20] sm:$0x3]
    %v27 = vld [vmem:[%s1] sm:$0xf]
    %v28 = vld [vmem:[%s1 + $0x4] sm:$0xf]
    %v29 = vld [vmem:[%s1 + $0x8] sm:$0xf]
    %v30 = vld [vmem:[%s1 + $0xc] sm:$0xf]
    %v31 = vld [vmem:[%s1 + $0x10] sm:$0xf]
    %v32 = vld [vmem:[%s1 + $0x14] sm:$0xf]
    %v33 = vld [vmem:[%s1 + $0x18] sm:$0xf]
    %v34 = vld [vmem:[%s1 + $0x1c] sm:$0xf]
    %v35 = vld [vmem:[%s1 + $0x20] sm:$0xf]
    %v36 = vld [vmem:[%s1 + $0x24] sm:$0xf]
    %v37 = vld [vmem:[%s1 + $0x28] sm:$0xf]
    %v38 = vld [vmem:[%s1 + $0x2c] sm:$0xf]
    %v39 = vld [vmem:[%s1 + $0x30] sm:$0xf]
    %v40 = vld [vmem:[%s1 + $0x34] sm:$0xf]
    %v41 = vld [vmem:[%s1 + $0x38] sm:$0xf]
    %v42 = vld [vmem:[%s1 + $0x3c] sm:$0xf]
    %v43 = vld [vmem:[%s18] sm:$0x7]
    %v44 = vld [vmem:[%s18 + $0x4] sm:$0x7]
    %v45 = vld [vmem:[%s18 + $0x8] sm:$0x7]
    %v46 = vld [vmem:[%s18 + $0xc] sm:$0x7]
    %v47 = vld [vmem:[%s18 + $0x14] sm:$0x7]
    %v48 = vld [vmem:[%s18 + $0x18] sm:$0x7]
    %v49 = vld [vmem:[%s18 + $0x1c] sm:$0x7]
    %v50 = vld [vmem:[%s18 + $0x20] sm:$0x7]
    %v60 = vunpack.c.l.s4 1983009808
    %v61 = vunpack.c.0.s8 %v60
    %v62 = vlaneseq
    %v63 = vshrl.u32 %v62, 7
    %v64 = vsub.s32 %v61, %v63
    %v65 = vrot.slane %v43, %v64
    %v66 = vcombine.high %v65, %v65
    %v68 = vunpack.c.l.s4 1983009808
    %v69 = vunpack.c.0.s8 %v68
    %v70 = vlaneseq
    %v71 = vshrl.u32 %v70, 7
    %v72 = vsub.s32 %v69, %v71
    %v73 = vrot.slane %v44, %v72
    %v74 = vcombine.high %v73, %v73
    %v76 = vunpack.c.l.s4 1983009808
    %v77 = vunpack.c.0.s8 %v76
    %v78 = vlaneseq
    %v79 = vshrl.u32 %v78, 7
    %v80 = vsub.s32 %v77, %v79
    %v81 = vrot.slane %v45, %v80
    %v82 = vcombine.high %v81, %v81
    %v84 = vunpack.c.l.s4 1983009808
    %v85 = vunpack.c.0.s8 %v84
    %v86 = vlaneseq
    %v87 = vshrl.u32 %v86, 7
    %v88 = vsub.s32 %v85, %v87
    %v89 = vrot.slane %v46, %v88
    %v90 = vcombine.high %v89, %v89
    %v92 = vunpack.c.l.s4 1983009808
    %v93 = vunpack.c.0.s8 %v92
    %v94 = vlaneseq
    %v95 = vshrl.u32 %v94, 7
    %v96 = vsub.s32 %v93, %v95
    %v97 = vrot.slane %v47, %v96
    %v98 = vcombine.high %v97, %v97
    %v100 = vunpack.c.l.s4 1983009808
    %v101 = vunpack.c.0.s8 %v100
    %v102 = vlaneseq
    %v103 = vshrl.u32 %v102, 7
    %v104 = vsub.s32 %v101, %v103
    %v105 = vrot.slane %v48, %v104
    %v106 = vcombine.high %v105, %v105
    %v108 = vunpack.c.l.s4 1983009808
    %v109 = vunpack.c.0.s8 %v108
    %v110 = vlaneseq
    %v111 = vshrl.u32 %v110, 7
    %v112 = vsub.s32 %v109, %v111
    %v113 = vrot.slane %v49, %v112
    %v114 = vcombine.high %v113, %v113
    %v116 = vunpack.c.l.s4 1983009808
    %v117 = vunpack.c.0.s8 %v116
    %v118 = vlaneseq
    %v119 = vshrl.u32 %v118, 7
    %v120 = vsub.s32 %v117, %v119
    %v121 = vrot.slane %v50, %v120
    %v122 = vcombine.high %v121, %v121
    %vm123 = vsmask.f32 1280
    %vm124 = vsmask.f32 3336
    %vm125 = vmor %vm123, %vm124
    %vm126 = vsmask.f32 5392
    %vm127 = vmor %vm125, %vm126
    %vm128 = vsmask.f32 7448
    %vm129 = vmor %vm127, %vm128
    %v131 = vshrl.u32 %v65, 16
    %v133 = vrot.slane %v131, 6
    %v134 = vshll.u32 %v65, 16
    %v136 = vrot.slane %v134, 7
    %v137 = vor.u32 %v133, %v136
    %v138 = vrot.slane %v137, 2
    %v140 = vshll.u32 %v66, 16
    %v142 = vrot.slane %v140, 7
    %v143 = vsel %vm129, %v138, %v142
    %v145 = vshrl.u32 %v73, 16
    %v147 = vrot.slane %v145, 6
    %v148 = vshll.u32 %v73, 16
    %v150 = vrot.slane %v148, 7
    %v151 = vor.u32 %v147, %v150
    %v152 = vrot.slane %v151, 2
    %v154 = vshll.u32 %v74, 16
    %v156 = vrot.slane %v154, 7
    %v157 = vsel %vm129, %v152, %v156
    %v159 = vshrl.u32 %v81, 16
    %v161 = vrot.slane %v159, 6
    %v162 = vshll.u32 %v81, 16
    %v164 = vrot.slane %v162, 7
    %v165 = vor.u32 %v161, %v164
    %v166 = vrot.slane %v165, 2
    %v168 = vshll.u32 %v82, 16
    %v170 = vrot.slane %v168, 7
    %v171 = vsel %vm129, %v166, %v170
    %v173 = vshrl.u32 %v89, 16
    %v175 = vrot.slane %v173, 6
    %v176 = vshll.u32 %v89, 16
    %v178 = vrot.slane %v176, 7
    %v179 = vor.u32 %v175, %v178
    %v180 = vrot.slane %v179, 2
    %v182 = vshll.u32 %v90, 16
    %v184 = vrot.slane %v182, 7
    %v185 = vsel %vm129, %v180, %v184
    %v187 = vshrl.u32 %v97, 16
    %v189 = vrot.slane %v187, 6
    %v190 = vshll.u32 %v97, 16
    %v192 = vrot.slane %v190, 7
    %v193 = vor.u32 %v189, %v192
    %v194 = vrot.slane %v193, 2
    %v196 = vshll.u32 %v98, 16
    %v198 = vrot.slane %v196, 7
    %v199 = vsel %vm129, %v194, %v198
    %v201 = vshrl.u32 %v105, 16
    %v203 = vrot.slane %v201, 6
    %v204 = vshll.u32 %v105, 16
    %v206 = vrot.slane %v204, 7
    %v207 = vor.u32 %v203, %v206
    %v208 = vrot.slane %v207, 2
    %v210 = vshll.u32 %v106, 16
    %v212 = vrot.slane %v210, 7
    %v213 = vsel %vm129, %v208, %v212
    %v215 = vshrl.u32 %v113, 16
    %v217 = vrot.slane %v215, 6
    %v218 = vshll.u32 %v113, 16
    %v220 = vrot.slane %v218, 7
    %v221 = vor.u32 %v217, %v220
    %v222 = vrot.slane %v221, 2
    %v224 = vshll.u32 %v114, 16
    %v226 = vrot.slane %v224, 7
    %v227 = vsel %vm129, %v222, %v226
    %v229 = vshrl.u32 %v121, 16
    %v231 = vrot.slane %v229, 6
    %v232 = vshll.u32 %v121, 16
    %v234 = vrot.slane %v232, 7
    %v235 = vor.u32 %v231, %v234
    %v236 = vrot.slane %v235, 2
    %v238 = vshll.u32 %v122, 16
    %v240 = vrot.slane %v238, 7
    %v241 = vsel %vm129, %v236, %v240
    %s242 = scalar_lea.vmem %s1, 64
    %v243 = vld [vmem:[%s242] sm:$0xf]
    %v244 = vld [vmem:[%s242 + $0x4] sm:$0xf]
    %v245 = vld [vmem:[%s242 + $0x8] sm:$0xf]
    %v246 = vld [vmem:[%s242 + $0xc] sm:$0xf]
    %v247 = vld [vmem:[%s242 + $0x10] sm:$0xf]
    %v248 = vld [vmem:[%s242 + $0x14] sm:$0xf]
    %v249 = vld [vmem:[%s242 + $0x18] sm:$0xf]
    %v250 = vld [vmem:[%s242 + $0x1c] sm:$0xf]
    %v251 = vld [vmem:[%s242 + $0x20] sm:$0xf]
    %v252 = vld [vmem:[%s242 + $0x24] sm:$0xf]
    %v253 = vld [vmem:[%s242 + $0x28] sm:$0xf]
    %v254 = vld [vmem:[%s242 + $0x2c] sm:$0xf]
    %v255 = vld [vmem:[%s242 + $0x30] sm:$0xf]
    %v256 = vld [vmem:[%s242 + $0x34] sm:$0xf]
    %v257 = vld [vmem:[%s242 + $0x38] sm:$0xf]
    %v258 = vld [vmem:[%s242 + $0x3c] sm:$0xf]
    %v259 = vcombine.low %v143, %v157
    %v260 = vcombine.low %v171, %v185
    %v262 = vunpack.c.l.s4 1983009808
    %v263 = vunpack.c.0.s8 %v262
    %v264 = vlaneseq
    %v265 = vshrl.u32 %v264, 7
    %v266 = vsub.s32 %v263, %v265
    %v267 = vrot.slane %v259, %v266
    %v269 = vunpack.c.l.s4 1983009808
    %v270 = vunpack.c.0.s8 %v269
    %v271 = vlaneseq
    %v272 = vshrl.u32 %v271, 7
    %v273 = vsub.s32 %v270, %v272
    %v274 = vrot.slane %v260, %v273
    %v275 = vcombine.low %v267, %v274
    %v276 = vcombine.low %v199, %v213
    %v277 = vcombine.low %v227, %v241
    %v279 = vunpack.c.l.s4 1983009808
    %v280 = vunpack.c.0.s8 %v279
    %v281 = vlaneseq
    %v282 = vshrl.u32 %v281, 7
    %v283 = vsub.s32 %v280, %v282
    %v284 = vrot.slane %v276, %v283
    %v286 = vunpack.c.l.s4 1983009808
    %v287 = vunpack.c.0.s8 %v286
    %v288 = vlaneseq
    %v289 = vshrl.u32 %v288, 7
    %v290 = vsub.s32 %v287, %v289
    %v291 = vrot.slane %v277, %v290
    %v292 = vcombine.low %v284, %v291
    %v311 = vunpack.c.l.b16 %v243
    %v312 = vunpack.c.l.b16 %v244
    %v313 = vunpack.c.l.b16 %v245
    %v314 = vunpack.c.l.b16 %v246
    %v315 = vunpack.c.l.b16 %v247
    %v316 = vunpack.c.l.b16 %v248
    %v317 = vunpack.c.l.b16 %v249
    %v318 = vunpack.c.l.b16 %v250
    %v319 = vunpack.c.l.b16 %v251
    %v320 = vunpack.c.l.b16 %v252
    %v321 = vunpack.c.l.b16 %v253
    %v322 = vunpack.c.l.b16 %v254
    %v323 = vunpack.c.l.b16 %v255
    %v324 = vunpack.c.l.b16 %v256
    %v325 = vunpack.c.l.b16 %v257
    %v326 = vunpack.c.l.b16 %v258
    %v327 = vpack.c.b16 %v312, %v311
    %v328 = vpack.c.b16 %v314, %v313
    %v329 = vpack.c.b16 %v316, %v315
    %v330 = vpack.c.b16 %v318, %v317
    %v331 = vpack.c.b16 %v320, %v319
    %v332 = vpack.c.b16 %v322, %v321
    %v333 = vpack.c.b16 %v324, %v323
    %v334 = vpack.c.b16 %v326, %v325
    %343 = vmatprep.subr.bf16.mxu0 0
    %344 = vmatpush1.bf16.msra.mxu0 %v327
    %345 = vmatprep.subr.bf16.mxu0 0
    %346 = vmatpush1.bf16.msra.mxu0 %v328
    %347 = vmatprep.subr.bf16.mxu0 0
    %348 = vmatpush1.bf16.msra.mxu0 %v329
    %349 = vmatprep.subr.bf16.mxu0 0
    %350 = vmatpush1.bf16.msra.mxu0 %v330
    %351 = vmatprep.subr.bf16.mxu0 0
    %352 = vmatpush1.bf16.msra.mxu0 %v331
    %353 = vmatprep.subr.bf16.mxu0 0
    %354 = vmatpush1.bf16.msra.mxu0 %v332
    %355 = vmatprep.subr.bf16.mxu0 0
    %356 = vmatpush1.bf16.msra.mxu0 %v333
    %357 = vmatprep.subr.bf16.mxu0 0
    %358 = vmatpush1.bf16.msra.mxu0 %v334
    %359 = vmatprep.subr.bf16.mxu0 0
    %360 = vmatpush1.bf16.msra.mxu0 0
    %361 = vmatprep.subr.bf16.mxu0 0
    %362 = vmatpush1.bf16.msra.mxu0 0
    %363 = vmatprep.subr.bf16.mxu0 0
    %364 = vmatpush1.bf16.msra.mxu0 0
    %365 = vmatprep.subr.bf16.mxu0 0
    %366 = vmatpush1.bf16.msra.mxu0 0
    %367 = vmatprep.subr.bf16.mxu0 0
    %368 = vmatpush1.bf16.msra.mxu0 0
    %369 = vmatprep.subr.bf16.mxu0 0
    %370 = vmatpush1.bf16.msra.mxu0 0
    %371 = vmatprep.subr.bf16.mxu0 0
    %372 = vmatpush1.bf16.msra.mxu0 0
    %373 = vmatprep.subr.bf16.mxu0 0
    %374 = vmatpush1.bf16.msra.mxu0 0
    %375 = vmatprep.mubr.bf16.mxu0 0
    %376 = vmatmul.mubr.bf16.gmra.mrb[0].mxu0 %v275
    %v377 = vpop.f32.mrb[0].mxu0
    %v378 = vadd.f32 0.0, %v377
    %v379 = vpop.f32.mrb[0].mxu0
    %v380 = vpop.f32.mrb[0].mxu0
    %v381 = vadd.f32 0.0, %v380
    %v382 = vpop.f32.mrb[0].mxu0
    %383 = vmatprep.mubr.bf16.mxu0 0
    %384 = vmatmul.mubr.bf16.gmra.mrb[0].mxu0 %v292
    %v385 = vpop.f32.mrb[0].mxu0
    %v386 = vadd.f32 0.0, %v385
    %v387 = vpop.f32.mrb[0].mxu0
    %v388 = vpop.f32.mrb[0].mxu0
    %v389 = vadd.f32 0.0, %v388
    %v390 = vpop.f32.mrb[0].mxu0
    %391 = vdwg.mxu0
    %v400 = vcombine.low %v19, %v20
    %v401 = vcombine.low %v21, %v22
    %v403 = vunpack.c.l.s4 1983009808
    %v404 = vunpack.c.0.s8 %v403
    %v405 = vlaneseq
    %v406 = vshrl.u32 %v405, 7
    %v407 = vsub.s32 %v404, %v406
    %v408 = vrot.slane %v400, %v407
    %v410 = vunpack.c.l.s4 1983009808
    %v411 = vunpack.c.0.s8 %v410
    %v412 = vlaneseq
    %v413 = vshrl.u32 %v412, 7
    %v414 = vsub.s32 %v411, %v413
    %v415 = vrot.slane %v401, %v414
    %v416 = vcombine.low %v408, %v415
    %v417 = vcombine.low %v23, %v24
    %v418 = vcombine.low %v25, %v26
    %v420 = vunpack.c.l.s4 1983009808
    %v421 = vunpack.c.0.s8 %v420
    %v422 = vlaneseq
    %v423 = vshrl.u32 %v422, 7
    %v424 = vsub.s32 %v421, %v423
    %v425 = vrot.slane %v417, %v424
    %v427 = vunpack.c.l.s4 1983009808
    %v428 = vunpack.c.0.s8 %v427
    %v429 = vlaneseq
    %v430 = vshrl.u32 %v429, 7
    %v431 = vsub.s32 %v428, %v430
    %v432 = vrot.slane %v418, %v431
    %v433 = vcombine.low %v425, %v432
    %v452 = vunpack.c.l.b16 %v27
    %v453 = vunpack.c.l.b16 %v28
    %v454 = vunpack.c.l.b16 %v29
    %v455 = vunpack.c.l.b16 %v30
    %v456 = vunpack.c.l.b16 %v31
    %v457 = vunpack.c.l.b16 %v32
    %v458 = vunpack.c.l.b16 %v33
    %v459 = vunpack.c.l.b16 %v34
    %v460 = vunpack.c.l.b16 %v35
    %v461 = vunpack.c.l.b16 %v36
    %v462 = vunpack.c.l.b16 %v37
    %v463 = vunpack.c.l.b16 %v38
    %v464 = vunpack.c.l.b16 %v39
    %v465 = vunpack.c.l.b16 %v40
    %v466 = vunpack.c.l.b16 %v41
    %v467 = vunpack.c.l.b16 %v42
    %v468 = vpack.c.b16 %v453, %v452
    %v469 = vpack.c.b16 %v455, %v454
    %v470 = vpack.c.b16 %v457, %v456
    %v471 = vpack.c.b16 %v459, %v458
    %v472 = vpack.c.b16 %v461, %v460
    %v473 = vpack.c.b16 %v463, %v462
    %v474 = vpack.c.b16 %v465, %v464
    %v475 = vpack.c.b16 %v467, %v466
    %484 = vmatprep.subr.bf16.mxu0 0
    %485 = vmatpush1.bf16.msra.mxu0 %v468
    %486 = vmatprep.subr.bf16.mxu0 0
    %487 = vmatpush1.bf16.msra.mxu0 %v469
    %488 = vmatprep.subr.bf16.mxu0 0
    %489 = vmatpush1.bf16.msra.mxu0 %v470
    %490 = vmatprep.subr.bf16.mxu0 0
    %491 = vmatpush1.bf16.msra.mxu0 %v471
    %492 = vmatprep.subr.bf16.mxu0 0
    %493 = vmatpush1.bf16.msra.mxu0 %v472
    %494 = vmatprep.subr.bf16.mxu0 0
    %495 = vmatpush1.bf16.msra.mxu0 %v473
    %496 = vmatprep.subr.bf16.mxu0 0
    %497 = vmatpush1.bf16.msra.mxu0 %v474
    %498 = vmatprep.subr.bf16.mxu0 0
    %499 = vmatpush1.bf16.msra.mxu0 %v475
    %500 = vmatprep.subr.bf16.mxu0 0
    %501 = vmatpush1.bf16.msra.mxu0 0
    %502 = vmatprep.subr.bf16.mxu0 0
    %503 = vmatpush1.bf16.msra.mxu0 0
    %504 = vmatprep.subr.bf16.mxu0 0
    %505 = vmatpush1.bf16.msra.mxu0 0
    %506 = vmatprep.subr.bf16.mxu0 0
    %507 = vmatpush1.bf16.msra.mxu0 0
    %508 = vmatprep.subr.bf16.mxu0 0
    %509 = vmatpush1.bf16.msra.mxu0 0
    %510 = vmatprep.subr.bf16.mxu0 0
    %511 = vmatpush1.bf16.msra.mxu0 0
    %512 = vmatprep.subr.bf16.mxu0 0
    %513 = vmatpush1.bf16.msra.mxu0 0
    %514 = vmatprep.subr.bf16.mxu0 0
    %515 = vmatpush1.bf16.msra.mxu0 0
    %516 = vmatprep.mubr.bf16.mxu0 0
    %517 = vmatmul.mubr.bf16.gmra.mrb[0].mxu0 %v416
    %v518 = vpop.f32.mrb[0].mxu0
    %v519 = vadd.f32 %v378, %v518
    %v520 = vpop.f32.mrb[0].mxu0
    %v521 = vpop.f32.mrb[0].mxu0
    %v522 = vadd.f32 %v381, %v521
    %v523 = vpop.f32.mrb[0].mxu0
    %524 = vmatprep.mubr.bf16.mxu0 0
    %525 = vmatmul.mubr.bf16.gmra.mrb[0].mxu0 %v433
    %v526 = vpop.f32.mrb[0].mxu0
    %v527 = vadd.f32 %v386, %v526
    %v528 = vpop.f32.mrb[0].mxu0
    %v529 = vpop.f32.mrb[0].mxu0
    %v530 = vadd.f32 %v389, %v529
    %v531 = vpop.f32.mrb[0].mxu0
    %532 = vdwg.mxu0
    %s533 = sadd.s32 %s16, 1
    %s534 = smul.addr %s533, 4
    %s535 = scalar_lea.vmem %s0, %s534
    %v536 = vld [vmem:[%s535] sm:$0x3]
    %v537 = vld [vmem:[%s535 + $0x4] sm:$0x3]
    %v538 = vld [vmem:[%s535 + $0x8] sm:$0x3]
    %v539 = vld [vmem:[%s535 + $0xc] sm:$0x3]
    %v540 = vld [vmem:[%s535 + $0x14] sm:$0x3]
    %v541 = vld [vmem:[%s535 + $0x18] sm:$0x3]
    %v542 = vld [vmem:[%s535 + $0x1c] sm:$0x3]
    %v543 = vld [vmem:[%s535 + $0x20] sm:$0x3]
    %s544 = scalar_lea.vmem %s1, 128
    %v545 = vld [vmem:[%s544] sm:$0xf]
    %v546 = vld [vmem:[%s544 + $0x4] sm:$0xf]
    %v547 = vld [vmem:[%s544 + $0x8] sm:$0xf]
    %v548 = vld [vmem:[%s544 + $0xc] sm:$0xf]
    %v549 = vld [vmem:[%s544 + $0x10] sm:$0xf]
    %v550 = vld [vmem:[%s544 + $0x14] sm:$0xf]
    %v551 = vld [vmem:[%s544 + $0x18] sm:$0xf]
    %v552 = vld [vmem:[%s544 + $0x1c] sm:$0xf]
    %v553 = vld [vmem:[%s544 + $0x20] sm:$0xf]
    %v554 = vld [vmem:[%s544 + $0x24] sm:$0xf]
    %v555 = vld [vmem:[%s544 + $0x28] sm:$0xf]
    %v556 = vld [vmem:[%s544 + $0x2c] sm:$0xf]
    %v557 = vld [vmem:[%s544 + $0x30] sm:$0xf]
    %v558 = vld [vmem:[%s544 + $0x34] sm:$0xf]
    %v559 = vld [vmem:[%s544 + $0x38] sm:$0xf]
    %v560 = vld [vmem:[%s544 + $0x3c] sm:$0xf]
    %v569 = vcombine.low %v536, %v537
    %v570 = vcombine.low %v538, %v539
    %v572 = vunpack.c.l.s4 1983009808
    %v573 = vunpack.c.0.s8 %v572
    %v574 = vlaneseq
    %v575 = vshrl.u32 %v574, 7
    %v576 = vsub.s32 %v573, %v575
    %v577 = vrot.slane %v569, %v576
    %v579 = vunpack.c.l.s4 1983009808
    %v580 = vunpack.c.0.s8 %v579
    %v581 = vlaneseq
    %v582 = vshrl.u32 %v581, 7
    %v583 = vsub.s32 %v580, %v582
    %v584 = vrot.slane %v570, %v583
    %v585 = vcombine.low %v577, %v584
    %v586 = vcombine.low %v540, %v541
    %v587 = vcombine.low %v542, %v543
    %v589 = vunpack.c.l.s4 1983009808
    %v590 = vunpack.c.0.s8 %v589
    %v591 = vlaneseq
    %v592 = vshrl.u32 %v591, 7
    %v593 = vsub.s32 %v590, %v592
    %v594 = vrot.slane %v586, %v593
    %v596 = vunpack.c.l.s4 1983009808
    %v597 = vunpack.c.0.s8 %v596
    %v598 = vlaneseq
    %v599 = vshrl.u32 %v598, 7
    %v600 = vsub.s32 %v597, %v599
    %v601 = vrot.slane %v587, %v600
    %v602 = vcombine.low %v594, %v601
    %v621 = vunpack.c.l.b16 %v545
    %v622 = vunpack.c.l.b16 %v546
    %v623 = vunpack.c.l.b16 %v547
    %v624 = vunpack.c.l.b16 %v548
    %v625 = vunpack.c.l.b16 %v549
    %v626 = vunpack.c.l.b16 %v550
    %v627 = vunpack.c.l.b16 %v551
    %v628 = vunpack.c.l.b16 %v552
    %v629 = vunpack.c.l.b16 %v553
    %v630 = vunpack.c.l.b16 %v554
    %v631 = vunpack.c.l.b16 %v555
    %v632 = vunpack.c.l.b16 %v556
    %v633 = vunpack.c.l.b16 %v557
    %v634 = vunpack.c.l.b16 %v558
    %v635 = vunpack.c.l.b16 %v559
    %v636 = vunpack.c.l.b16 %v560
    %v637 = vpack.c.b16 %v622, %v621
    %v638 = vpack.c.b16 %v624, %v623
    %v639 = vpack.c.b16 %v626, %v625
    %v640 = vpack.c.b16 %v628, %v627
    %v641 = vpack.c.b16 %v630, %v629
    %v642 = vpack.c.b16 %v632, %v631
    %v643 = vpack.c.b16 %v634, %v633
    %v644 = vpack.c.b16 %v636, %v635
    %653 = vmatprep.subr.bf16.mxu0 0
    %654 = vmatpush1.bf16.msra.mxu0 %v637
    %655 = vmatprep.subr.bf16.mxu0 0
    %656 = vmatpush1.bf16.msra.mxu0 %v638
    %657 = vmatprep.subr.bf16.mxu0 0
    %658 = vmatpush1.bf16.msra.mxu0 %v639
    %659 = vmatprep.subr.bf16.mxu0 0
    %660 = vmatpush1.bf16.msra.mxu0 %v640
    %661 = vmatprep.subr.bf16.mxu0 0
    %662 = vmatpush1.bf16.msra.mxu0 %v641
    %663 = vmatprep.subr.bf16.mxu0 0
    %664 = vmatpush1.bf16.msra.mxu0 %v642
    %665 = vmatprep.subr.bf16.mxu0 0
    %666 = vmatpush1.bf16.msra.mxu0 %v643
    %667 = vmatprep.subr.bf16.mxu0 0
    %668 = vmatpush1.bf16.msra.mxu0 %v644
    %669 = vmatprep.subr.bf16.mxu0 0
    %670 = vmatpush1.bf16.msra.mxu0 0
    %671 = vmatprep.subr.bf16.mxu0 0
    %672 = vmatpush1.bf16.msra.mxu0 0
    %673 = vmatprep.subr.bf16.mxu0 0
    %674 = vmatpush1.bf16.msra.mxu0 0
    %675 = vmatprep.subr.bf16.mxu0 0
    %676 = vmatpush1.bf16.msra.mxu0 0
    %677 = vmatprep.subr.bf16.mxu0 0
    %678 = vmatpush1.bf16.msra.mxu0 0
    %679 = vmatprep.subr.bf16.mxu0 0
    %680 = vmatpush1.bf16.msra.mxu0 0
    %681 = vmatprep.subr.bf16.mxu0 0
    %682 = vmatpush1.bf16.msra.mxu0 0
    %683 = vmatprep.subr.bf16.mxu0 0
    %684 = vmatpush1.bf16.msra.mxu0 0
    %685 = vmatprep.mubr.bf16.mxu0 0
    %686 = vmatmul.mubr.bf16.gmra.mrb[0].mxu0 %v585
    %v687 = vpop.f32.mrb[0].mxu0
    %v688 = vadd.f32 0.0, %v687
    %v689 = vpop.f32.mrb[0].mxu0
    %v690 = vpop.f32.mrb[0].mxu0
    %v691 = vadd.f32 0.0, %v690
    %v692 = vpop.f32.mrb[0].mxu0
    %693 = vmatprep.mubr.bf16.mxu0 0
    %694 = vmatmul.mubr.bf16.gmra.mrb[0].mxu0 %v602
    %v695 = vpop.f32.mrb[0].mxu0
    %v696 = vadd.f32 0.0, %v695
    %v697 = vpop.f32.mrb[0].mxu0
    %v698 = vpop.f32.mrb[0].mxu0
    %v699 = vadd.f32 0.0, %v698
    %v700 = vpop.f32.mrb[0].mxu0
    %701 = vdwg.mxu0
    %v702 = vadd.f32 %v519, %v688
    %v703 = vadd.f32 %v522, %v691
    %v704 = vadd.f32 %v527, %v696
    %v705 = vadd.f32 %v530, %v699
    %v706 = vld [vmem:[%s535] sm:$0x7]
    %v707 = vld [vmem:[%s535 + $0x4] sm:$0x7]
    %v708 = vld [vmem:[%s535 + $0x8] sm:$0x7]
    %v709 = vld [vmem:[%s535 + $0xc] sm:$0x7]
    %v710 = vld [vmem:[%s535 + $0x14] sm:$0x7]
    %v711 = vld [vmem:[%s535 + $0x18] sm:$0x7]
    %v712 = vld [vmem:[%s535 + $0x1c] sm:$0x7]
    %v713 = vld [vmem:[%s535 + $0x20] sm:$0x7]
    %v723 = vunpack.c.l.s4 1983009808
    %v724 = vunpack.c.0.s8 %v723
    %v725 = vlaneseq
    %v726 = vshrl.u32 %v725, 7
    %v727 = vsub.s32 %v724, %v726
    %v728 = vrot.slane %v706, %v727
    %v729 = vcombine.high %v728, %v728
    %v731 = vunpack.c.l.s4 1983009808
    %v732 = vunpack.c.0.s8 %v731
    %v733 = vlaneseq
    %v734 = vshrl.u32 %v733, 7
    %v735 = vsub.s32 %v732, %v734
    %v736 = vrot.slane %v707, %v735
    %v737 = vcombine.high %v736, %v736
    %v739 = vunpack.c.l.s4 1983009808
    %v740 = vunpack.c.0.s8 %v739
    %v741 = vlaneseq
    %v742 = vshrl.u32 %v741, 7
    %v743 = vsub.s32 %v740, %v742
    %v744 = vrot.slane %v708, %v743
    %v745 = vcombine.high %v744, %v744
    %v747 = vunpack.c.l.s4 1983009808
    %v748 = vunpack.c.0.s8 %v747
    %v749 = vlaneseq
    %v750 = vshrl.u32 %v749, 7
    %v751 = vsub.s32 %v748, %v750
    %v752 = vrot.slane %v709, %v751
    %v753 = vcombine.high %v752, %v752
    %v755 = vunpack.c.l.s4 1983009808
    %v756 = vunpack.c.0.s8 %v755
    %v757 = vlaneseq
    %v758 = vshrl.u32 %v757, 7
    %v759 = vsub.s32 %v756, %v758
    %v760 = vrot.slane %v710, %v759
    %v761 = vcombine.high %v760, %v760
    %v763 = vunpack.c.l.s4 1983009808
    %v764 = vunpack.c.0.s8 %v763
    %v765 = vlaneseq
    %v766 = vshrl.u32 %v765, 7
    %v767 = vsub.s32 %v764, %v766
    %v768 = vrot.slane %v711, %v767
    %v769 = vcombine.high %v768, %v768
    %v771 = vunpack.c.l.s4 1983009808
    %v772 = vunpack.c.0.s8 %v771
    %v773 = vlaneseq
    %v774 = vshrl.u32 %v773, 7
    %v775 = vsub.s32 %v772, %v774
    %v776 = vrot.slane %v712, %v775
    %v777 = vcombine.high %v776, %v776
    %v779 = vunpack.c.l.s4 1983009808
    %v780 = vunpack.c.0.s8 %v779
    %v781 = vlaneseq
    %v782 = vshrl.u32 %v781, 7
    %v783 = vsub.s32 %v780, %v782
    %v784 = vrot.slane %v713, %v783
    %v785 = vcombine.high %v784, %v784
    %v787 = vshrl.u32 %v728, 16
    %v789 = vrot.slane %v787, 6
    %v790 = vshll.u32 %v728, 16
    %v792 = vrot.slane %v790, 7
    %v793 = vor.u32 %v789, %v792
    %v794 = vrot.slane %v793, 2
    %v796 = vshll.u32 %v729, 16
    %v798 = vrot.slane %v796, 7
    %v799 = vsel %vm129, %v794, %v798
    %v801 = vshrl.u32 %v736, 16
    %v803 = vrot.slane %v801, 6
    %v804 = vshll.u32 %v736, 16
    %v806 = vrot.slane %v804, 7
    %v807 = vor.u32 %v803, %v806
    %v808 = vrot.slane %v807, 2
    %v810 = vshll.u32 %v737, 16
    %v812 = vrot.slane %v810, 7
    %v813 = vsel %vm129, %v808, %v812
    %v815 = vshrl.u32 %v744, 16
    %v817 = vrot.slane %v815, 6
    %v818 = vshll.u32 %v744, 16
    %v820 = vrot.slane %v818, 7
    %v821 = vor.u32 %v817, %v820
    %v822 = vrot.slane %v821, 2
    %v824 = vshll.u32 %v745, 16
    %v826 = vrot.slane %v824, 7
    %v827 = vsel %vm129, %v822, %v826
    %v829 = vshrl.u32 %v752, 16
    %v831 = vrot.slane %v829, 6
    %v832 = vshll.u32 %v752, 16
    %v834 = vrot.slane %v832, 7
    %v835 = vor.u32 %v831, %v834
    %v836 = vrot.slane %v835, 2
    %v838 = vshll.u32 %v753, 16
    %v840 = vrot.slane %v838, 7
    %v841 = vsel %vm129, %v836, %v840
    %v843 = vshrl.u32 %v760, 16
    %v845 = vrot.slane %v843, 6
    %v846 = vshll.u32 %v760, 16
    %v848 = vrot.slane %v846, 7
    %v849 = vor.u32 %v845, %v848
    %v850 = vrot.slane %v849, 2
    %v852 = vshll.u32 %v761, 16
    %v854 = vrot.slane %v852, 7
    %v855 = vsel %vm129, %v850, %v854
    %v857 = vshrl.u32 %v768, 16
    %v859 = vrot.slane %v857, 6
    %v860 = vshll.u32 %v768, 16
    %v862 = vrot.slane %v860, 7
    %v863 = vor.u32 %v859, %v862
    %v864 = vrot.slane %v863, 2
    %v866 = vshll.u32 %v769, 16
    %v868 = vrot.slane %v866, 7
    %v869 = vsel %vm129, %v864, %v868
    %v871 = vshrl.u32 %v776, 16
    %v873 = vrot.slane %v871, 6
    %v874 = vshll.u32 %v776, 16
    %v876 = vrot.slane %v874, 7
    %v877 = vor.u32 %v873, %v876
    %v878 = vrot.slane %v877, 2
    %v880 = vshll.u32 %v777, 16
    %v882 = vrot.slane %v880, 7
    %v883 = vsel %vm129, %v878, %v882
    %v885 = vshrl.u32 %v784, 16
    %v887 = vrot.slane %v885, 6
    %v888 = vshll.u32 %v784, 16
    %v890 = vrot.slane %v888, 7
    %v891 = vor.u32 %v887, %v890
    %v892 = vrot.slane %v891, 2
    %v894 = vshll.u32 %v785, 16
    %v896 = vrot.slane %v894, 7
    %v897 = vsel %vm129, %v892, %v896
    %s898 = scalar_lea.vmem %s1, 192
    %v899 = vld [vmem:[%s898] sm:$0xf]
    %v900 = vld [vmem:[%s898 + $0x4] sm:$0xf]
    %v901 = vld [vmem:[%s898 + $0x8] sm:$0xf]
    %v902 = vld [vmem:[%s898 + $0xc] sm:$0xf]
    %v903 = vld [vmem:[%s898 + $0x10] sm:$0xf]
    %v904 = vld [vmem:[%s898 + $0x14] sm:$0xf]
    %v905 = vld [vmem:[%s898 + $0x18] sm:$0xf]
    %v906 = vld [vmem:[%s898 + $0x1c] sm:$0xf]
    %v907 = vld [vmem:[%s898 + $0x20] sm:$0xf]
    %v908 = vld [vmem:[%s898 + $0x24] sm:$0xf]
    %v909 = vld [vmem:[%s898 + $0x28] sm:$0xf]
    %v910 = vld [vmem:[%s898 + $0x2c] sm:$0xf]
    %v911 = vld [vmem:[%s898 + $0x30] sm:$0xf]
    %v912 = vld [vmem:[%s898 + $0x34] sm:$0xf]
    %v913 = vld [vmem:[%s898 + $0x38] sm:$0xf]
    %v914 = vld [vmem:[%s898 + $0x3c] sm:$0xf]
    %v915 = vcombine.low %v799, %v813
    %v916 = vcombine.low %v827, %v841
    %v918 = vunpack.c.l.s4 1983009808
    %v919 = vunpack.c.0.s8 %v918
    %v920 = vlaneseq
    %v921 = vshrl.u32 %v920, 7
    %v922 = vsub.s32 %v919, %v921
    %v923 = vrot.slane %v915, %v922
    %v925 = vunpack.c.l.s4 1983009808
    %v926 = vunpack.c.0.s8 %v925
    %v927 = vlaneseq
    %v928 = vshrl.u32 %v927, 7
    %v929 = vsub.s32 %v926, %v928
    %v930 = vrot.slane %v916, %v929
    %v931 = vcombine.low %v923, %v930
    %v932 = vcombine.low %v855, %v869
    %v933 = vcombine.low %v883, %v897
    %v935 = vunpack.c.l.s4 1983009808
    %v936 = vunpack.c.0.s8 %v935
    %v937 = vlaneseq
    %v938 = vshrl.u32 %v937, 7
    %v939 = vsub.s32 %v936, %v938
    %v940 = vrot.slane %v932, %v939
    %v942 = vunpack.c.l.s4 1983009808
    %v943 = vunpack.c.0.s8 %v942
    %v944 = vlaneseq
    %v945 = vshrl.u32 %v944, 7
    %v946 = vsub.s32 %v943, %v945
    %v947 = vrot.slane %v933, %v946
    %v948 = vcombine.low %v940, %v947
    %v967 = vunpack.c.l.b16 %v899
    %v968 = vunpack.c.l.b16 %v900
    %v969 = vunpack.c.l.b16 %v901
    %v970 = vunpack.c.l.b16 %v902
    %v971 = vunpack.c.l.b16 %v903
    %v972 = vunpack.c.l.b16 %v904
    %v973 = vunpack.c.l.b16 %v905
    %v974 = vunpack.c.l.b16 %v906
    %v975 = vunpack.c.l.b16 %v907
    %v976 = vunpack.c.l.b16 %v908
    %v977 = vunpack.c.l.b16 %v909
    %v978 = vunpack.c.l.b16 %v910
    %v979 = vunpack.c.l.b16 %v911
    %v980 = vunpack.c.l.b16 %v912
    %v981 = vunpack.c.l.b16 %v913
    %v982 = vunpack.c.l.b16 %v914
    %v983 = vpack.c.b16 %v968, %v967
    %v984 = vpack.c.b16 %v970, %v969
    %v985 = vpack.c.b16 %v972, %v971
    %v986 = vpack.c.b16 %v974, %v973
    %v987 = vpack.c.b16 %v976, %v975
    %v988 = vpack.c.b16 %v978, %v977
    %v989 = vpack.c.b16 %v980, %v979
    %v990 = vpack.c.b16 %v982, %v981
    %999 = vmatprep.subr.bf16.mxu0 0
    %1000 = vmatpush1.bf16.msra.mxu0 %v983
    %1001 = vmatprep.subr.bf16.mxu0 0
    %1002 = vmatpush1.bf16.msra.mxu0 %v984
    %1003 = vmatprep.subr.bf16.mxu0 0
    %1004 = vmatpush1.bf16.msra.mxu0 %v985
    %1005 = vmatprep.subr.bf16.mxu0 0
    %1006 = vmatpush1.bf16.msra.mxu0 %v986
    %1007 = vmatprep.subr.bf16.mxu0 0
    %1008 = vmatpush1.bf16.msra.mxu0 %v987
    %1009 = vmatprep.subr.bf16.mxu0 0
    %1010 = vmatpush1.bf16.msra.mxu0 %v988
    %1011 = vmatprep.subr.bf16.mxu0 0
    %1012 = vmatpush1.bf16.msra.mxu0 %v989
    %1013 = vmatprep.subr.bf16.mxu0 0
    %1014 = vmatpush1.bf16.msra.mxu0 %v990
    %1015 = vmatprep.subr.bf16.mxu0 0
    %1016 = vmatpush1.bf16.msra.mxu0 0
    %1017 = vmatprep.subr.bf16.mxu0 0
    %1018 = vmatpush1.bf16.msra.mxu0 0
    %1019 = vmatprep.subr.bf16.mxu0 0
    %1020 = vmatpush1.bf16.msra.mxu0 0
    %1021 = vmatprep.subr.bf16.mxu0 0
    %1022 = vmatpush1.bf16.msra.mxu0 0
    %1023 = vmatprep.subr.bf16.mxu0 0
    %1024 = vmatpush1.bf16.msra.mxu0 0
    %1025 = vmatprep.subr.bf16.mxu0 0
    %1026 = vmatpush1.bf16.msra.mxu0 0
    %1027 = vmatprep.subr.bf16.mxu0 0
    %1028 = vmatpush1.bf16.msra.mxu0 0
    %1029 = vmatprep.subr.bf16.mxu0 0
    %1030 = vmatpush1.bf16.msra.mxu0 0
    %1031 = vmatprep.mubr.bf16.mxu0 0
    %1032 = vmatmul.mubr.bf16.gmra.mrb[0].mxu0 %v931
    %v1033 = vpop.f32.mrb[0].mxu0
    %v1034 = vadd.f32 0.0, %v1033
    %v1035 = vpop.f32.mrb[0].mxu0
    %v1036 = vpop.f32.mrb[0].mxu0
    %v1037 = vadd.f32 0.0, %v1036
    %v1038 = vpop.f32.mrb[0].mxu0
    %1039 = vmatprep.mubr.bf16.mxu0 0
    %1040 = vmatmul.mubr.bf16.gmra.mrb[0].mxu0 %v948
    %v1041 = vpop.f32.mrb[0].mxu0
    %v1042 = vadd.f32 0.0, %v1041
    %v1043 = vpop.f32.mrb[0].mxu0
    %v1044 = vpop.f32.mrb[0].mxu0
    %v1045 = vadd.f32 0.0, %v1044
    %v1046 = vpop.f32.mrb[0].mxu0
    %1047 = vdwg.mxu0
    %v1048 = vadd.f32 %v702, %v1034
    %v1049 = vadd.f32 %v703, %v1037
    %v1050 = vadd.f32 %v704, %v1042
    %v1051 = vadd.f32 %v705, %v1045
    %v1052 = vld [vmem:[%s2] sm:$0x1]
    %v1054 = vlaneseq
    %v1055 = vshrl.u32 %v1054, 7
    %v1056 = vsub.s32 0, %v1055
    %v1057 = vrot.slane %v1052, %v1056
    %v1059 = vadd.f32 %v1048, %v1057
    %v1060 = vadd.f32 %v1049, %v1057
    %v1061 = vadd.f32 %v1050, %v1057
    %v1062 = vadd.f32 %v1051, %v1057
    %v1063 = vmax.f32 %v1059, 0.0
    %v1064 = vmax.f32 %v1060, 0.0
    %v1065 = vmax.f32 %v1061, 0.0
    %v1066 = vmax.f32 %v1062, 0.0
    %v1071 = vcombine.high %v1063, %v1063
    %v1072 = vcombine.high %v1064, %v1064
    %v1073 = vcombine.high %v1065, %v1065
    %v1074 = vcombine.high %v1066, %v1066
    %1079 = vst [vmem:[#allocation2] sm:$0xf] %v1063
    %1080 = vst [vmem:[#allocation2 + $0x4] sm:$0xf] %v1071
    %1081 = vst [vmem:[#allocation2 + $0x8] sm:$0xf] %v1064
    %1082 = vst [vmem:[#allocation2 + $0xc] sm:$0xf] %v1072
    %1083 = vst [vmem:[#allocation2 + $0x10] sm:$0xf] %v1065
    %1084 = vst [vmem:[#allocation2 + $0x14] sm:$0xf] %v1073
    %1085 = vst [vmem:[#allocation2 + $0x18] sm:$0xf] %v1066
    %1086 = vst [vmem:[#allocation2 + $0x1c] sm:$0xf] %v1074
    // Predicated region
    $region14: #{_lambda_.3} parent=1 // pred_check
      _
    $region15: #{_lambda_.3} parent=1 // pred_check_branch
      %1088 = sbr.rel (0) target = $region17
    $region16: #{_lambda_.3} parent=1 // pred_region
      %s1090 = ssub.s32 512, 512
      %1091 = vsyncadd [#allocation3], %s1090
      %s1092 = sshll.u32 [#allocation2], 4
      %s1093 = int_to_ptr.vmem [resolvable:$true] %s1092
      %1098 = dma.vmem_to_hbm [thread:$0]  %s1093, 512, %s3, [#allocation3], 64, 64, 4
    $region17: #{_lambda_.3} parent=1 // pred_fallthru
      _
    // Predicated region
    $region18: #{_lambda_.3} parent=1 // pred_check
      _
    $region19: #{_lambda_.3} parent=1 // pred_check_branch
      %1100 = sbr.rel (0) target = $region21
    $region20: #{_lambda_.3} parent=1 // pred_region
      %1101 = dma.done [#allocation3], 512
    $region21: #{_lambda_.3} parent=1 // pred_fallthru
      _
    %1102 = vsyncpa [#allocation3], 1

</llo_original>
